<compile_context>
chip_gen: v6e
topology: v6e:2x2x1
jax: 0.10.0
libtpu: 0.0.40
codegen_flags: <defaults>
</compile_context>

<pallas_src>
import functools

import jax
import jax.numpy as jnp
from jax.experimental import pallas as pl
from jax.experimental.pallas import tpu as pltpu


def _layernorm(v, g, b, eps=1e-5):
    mu = jnp.mean(v, axis=-1, keepdims=True)
    var = jnp.mean((v - mu) ** 2, axis=-1, keepdims=True)
    return (v - mu) * jax.lax.rsqrt(var + eps) * g + b


def block_kernel(n_heads,
                 x_ref, ln1g_ref, ln1b_ref,
                 wq_ref, wk_ref, wv_ref, wp_ref, bp_ref,
                 ln2g_ref, ln2b_ref, w1_ref, fb1_ref, w2_ref, fb2_ref,
                 o_ref, attn_ref):
    # Grid: (batch, query-tile). Full sequence (for K/V) is resident per batch.
    T, C = x_ref.shape[1], x_ref.shape[2]
    tq = o_ref.shape[1]
    hs = C // n_heads
    scale = C ** (-0.5)   # NOTE: torch code scales by n_embd**-0.5, not head_size**-0.5

    x_full = x_ref[0]                                   # (T, C) f32

    if tq == T:                                         # static branch (trace time)
        q0 = 0
        x_q = x_full
    else:
        q0 = pl.multiple_of(pl.program_id(1) * tq, tq)
        x_q = x_ref[0, pl.ds(q0, tq), :]                # (tq, C) query rows

    # ---- LayerNorm 1 (f32) ----
    g1 = ln1g_ref[...]
    be1 = ln1b_ref[...]
    xfn = _layernorm(x_full, g1, be1)                   # rows feeding K/V
    xqn = xfn if tq == T else _layernorm(x_q, g1, be1)  # rows feeding Q

    # ---- fused dense projections: bf16 operands, f32 accumulation ----
    q = jnp.dot(xqn.astype(jnp.bfloat16), wq_ref[...],
                preferred_element_type=jnp.float32) * scale      # (tq, C)
    k = jnp.dot(xfn.astype(jnp.bfloat16), wk_ref[...],
                preferred_element_type=jnp.float32)              # (T, C)
    v = jnp.dot(xfn.astype(jnp.bfloat16), wv_ref[...],
                preferred_element_type=jnp.float32)              # (T, C)

    # ---- causal mask for this query tile (large finite negative, NaN-safe) ----
    rows = q0 + jax.lax.broadcasted_iota(jnp.int32, (tq, T), 0)
    cols = jax.lax.broadcasted_iota(jnp.int32, (tq, T), 1)
    causal = rows >= cols

    # ---- per-head attention, results written into lane-contiguous VMEM slab ----
    for h in range(n_heads):                            # n_heads small & static
        sl = slice(h * hs, (h + 1) * hs)
        qh = q[:, sl].astype(jnp.bfloat16)              # (tq, hs)
        kh = k[:, sl].astype(jnp.bfloat16)              # (T, hs)
        vh = v[:, sl].astype(jnp.bfloat16)              # (T, hs)
        s = jax.lax.dot_general(qh, kh, (((1,), (1,)), ((), ())),
                                preferred_element_type=jnp.float32)  # (tq, T)
        s = jnp.where(causal, s, -1e30)
        s = s - jnp.max(s, axis=-1, keepdims=True)
        p = jnp.exp(s)
        p = p * pl.reciprocal(jnp.sum(p, axis=-1, keepdims=True), approx=True)
        attn_ref[:, sl] = jnp.dot(p.astype(jnp.bfloat16), vh,
                                  preferred_element_type=jnp.float32)

    attn = jnp.dot(attn_ref[...].astype(jnp.bfloat16), wp_ref[...],
                   preferred_element_type=jnp.float32) + bp_ref[...]
    x1 = x_q + attn                                     # residual 1

    # ---- LayerNorm 2 + FeedForward ----
    xn2 = _layernorm(x1, ln2g_ref[...], ln2b_ref[...])
    h1 = jnp.dot(xn2.astype(jnp.bfloat16), w1_ref[...],
                 preferred_element_type=jnp.float32) + fb1_ref[...]
    h1 = jnp.maximum(h1, 0.0)                           # ReLU
    ff = jnp.dot(h1.astype(jnp.bfloat16), w2_ref[...],
                 preferred_element_type=jnp.float32) + fb2_ref[...]

    o_ref[0] = x1 + ff                                  # residual 2


def transformer_block(x, params, n_heads):
    B, T, C = x.shape
    H4 = 4 * C

    # Query-tile size: whole sequence if small, else 128-row tiles.
    tq = T if T <= 128 else 128
    assert T % tq == 0, "T must be divisible by the query tile size"
    n_q = T // tq

    (ln1g, ln1b, wq, wk, wv, wp, bp, ln2g, ln2b, w1, b1, w2, b2) = params
    bf = lambda w: w.astype(jnp.bfloat16)   # matmul weights stored bf16

    full = lambda shape: pl.BlockSpec(shape, lambda b, qi, _s=shape: (0,) * len(_s))

    return pl.pallas_call(
        functools.partial(block_kernel, n_heads),
        out_shape=jax.ShapeDtypeStruct((B, T, C), jnp.float32),
        grid_spec=pltpu.PrefetchScalarGridSpec(
            num_scalar_prefetch=0,
            grid=(B, n_q),
            in_specs=[
                pl.BlockSpec((1, T, C), lambda b, qi: (b, 0, 0)),  # x (full seq)
                full((1, C)), full((1, C)),                        # ln1 gamma, beta
                full((C, C)),                                      # Wq (packed heads)
                full((C, C)),                                      # Wk
                full((C, C)),                                      # Wv
                full((C, C)), full((1, C)),                        # Wproj, bproj
                full((1, C)), full((1, C)),                        # ln2 gamma, beta
                full((C, H4)), full((1, H4)),                      # W1, b1
                full((H4, C)), full((1, C)),                       # W2, b2
            ],
            out_specs=pl.BlockSpec((1, tq, C), lambda b, qi: (b, qi, 0)),
            scratch_shapes=[pltpu.VMEM((tq, C), jnp.float32)],     # head-output slab
        ),
        compiler_params=pltpu.CompilerParams(
            dimension_semantics=("parallel", "parallel"),
            vmem_limit_bytes=64 * 1024 * 1024,
        ),
    )(x, ln1g, ln1b, bf(wq), bf(wk), bf(wv), bf(wp), bp,
      ln2g, ln2b, bf(w1), b1, bf(w2), b2)


def reference_block(x, params, n_heads):
    """Pure-JAX f32 reference mirroring the PyTorch forward (eval mode)."""
    (ln1g, ln1b, wq, wk, wv, wp, bp, ln2g, ln2b, w1, b1, w2, b2) = params
    B, T, C = x.shape
    hs = C // n_heads
    xn = _layernorm(x, ln1g, ln1b)
    causal = jnp.tril(jnp.ones((T, T), dtype=bool))
    outs = []
    for h in range(n_heads):
        sl = slice(h * hs, (h + 1) * hs)
        q = xn @ wq[:, sl]
        k = xn @ wk[:, sl]
        v = xn @ wv[:, sl]
        w = (q @ jnp.swapaxes(k, -2, -1)) * (C ** -0.5)
        w = jnp.where(causal, w, -jnp.inf)
        w = jax.nn.softmax(w, axis=-1)
        outs.append(w @ v)
    attn = jnp.concatenate(outs, axis=-1) @ wp + bp
    x1 = x + attn
    xn2 = _layernorm(x1, ln2g, ln2b)
    ff = jnp.maximum(xn2 @ w1 + b1, 0.0) @ w2 + b2
    return x1 + ff


def init_params(key, n_embd, n_heads):
    """Weights packed densely: per-head Q/K/V weights concatenated on the
    output axis, i.e. head h owns columns [h*hs, (h+1)*hs)."""
    H4 = 4 * n_embd
    ks = jax.random.split(key, 8)
    s = 0.02
    return (
        jnp.ones((1, n_embd), jnp.float32),                                # ln1 gamma
        jnp.zeros((1, n_embd), jnp.float32),                               # ln1 beta
        s * jax.random.normal(ks[0], (n_embd, n_embd), jnp.float32),       # Wq (all heads)
        s * jax.random.normal(ks[1], (n_embd, n_embd), jnp.float32),       # Wk
        s * jax.random.normal(ks[2], (n_embd, n_embd), jnp.float32),       # Wv
        s * jax.random.normal(ks[3], (n_embd, n_embd), jnp.float32),       # Wproj
        s * jax.random.normal(ks[4], (1, n_embd), jnp.float32),            # bproj
        jnp.ones((1, n_embd), jnp.float32),                                # ln2 gamma
        jnp.zeros((1, n_embd), jnp.float32),                               # ln2 beta
        s * jax.random.normal(ks[5], (n_embd, H4), jnp.float32),           # W1
        s * jax.random.normal(ks[6], (1, H4), jnp.float32),                # b1
        s * jax.random.normal(ks[7], (H4, n_embd), jnp.float32),           # W2
        jnp.zeros((1, n_embd), jnp.float32),                               # b2
    )


if __name__ == "__main__":
    B, T, C, n_heads = 2, 8, 32, 4   # block_size == T

    key = jax.random.PRNGKey(0)
    kx, kp = jax.random.split(key)
    x = jax.random.normal(kx, (B, T, C), jnp.float32)
    params = init_params(kp, C, n_heads)

    out = jax.block_until_ready(transformer_block(x, params, n_heads))
    ref = reference_block(x, params, n_heads)

    assert out.shape == (B, T, C)
    # bf16 matmul operands vs f32 reference -> relaxed tolerance.
    assert jnp.allclose(out, ref, atol=2e-2, rtol=2e-2), "mismatch vs reference"

    print("KERNEL_OK")
</pallas_src>

<mosaic_0001>
module attributes {stable_mosaic.version = 11 : i64} {
  func.func @block_kernel(%arg0: i32, %arg1: i32, %arg2: memref<1x8x32xf32, #tpu.memory_space<vmem>>, %arg3: memref<1x32xf32, #tpu.memory_space<vmem>>, %arg4: memref<1x32xf32, #tpu.memory_space<vmem>>, %arg5: memref<32x32xbf16, #tpu.memory_space<vmem>>, %arg6: memref<32x32xbf16, #tpu.memory_space<vmem>>, %arg7: memref<32x32xbf16, #tpu.memory_space<vmem>>, %arg8: memref<32x32xbf16, #tpu.memory_space<vmem>>, %arg9: memref<1x32xf32, #tpu.memory_space<vmem>>, %arg10: memref<1x32xf32, #tpu.memory_space<vmem>>, %arg11: memref<1x32xf32, #tpu.memory_space<vmem>>, %arg12: memref<32x128xbf16, #tpu.memory_space<vmem>>, %arg13: memref<1x128xf32, #tpu.memory_space<vmem>>, %arg14: memref<128x32xbf16, #tpu.memory_space<vmem>>, %arg15: memref<1x32xf32, #tpu.memory_space<vmem>>, %arg16: memref<1x8x32xf32, #tpu.memory_space<vmem>>, %arg17: memref<8x32xf32, #tpu.memory_space<vmem>>) attributes {dimension_semantics = [#tpu.dimension_semantics<parallel>, #tpu.dimension_semantics<parallel>], iteration_bounds = array<i64: 2, 1>, scalar_prefetch = 0 : i64, scratch_operands = 1 : i64, tpu.core_type = #tpu.core_type<tc>, window_params = [{transform_indices = @transform_0, window_bounds = array<i64: 1, 8, 32>}, {pipeline_mode = #tpu.pipeline_mode<synchronous>, transform_indices = @transform_1, window_bounds = array<i64: 1, 32>}, {pipeline_mode = #tpu.pipeline_mode<synchronous>, transform_indices = @transform_2, window_bounds = array<i64: 1, 32>}, {pipeline_mode = #tpu.pipeline_mode<synchronous>, transform_indices = @transform_3, window_bounds = array<i64: 32, 32>}, {pipeline_mode = #tpu.pipeline_mode<synchronous>, transform_indices = @transform_4, window_bounds = array<i64: 32, 32>}, {pipeline_mode = #tpu.pipeline_mode<synchronous>, transform_indices = @transform_5, window_bounds = array<i64: 32, 32>}, {pipeline_mode = #tpu.pipeline_mode<synchronous>, transform_indices = @transform_6, window_bounds = array<i64: 32, 32>}, {pipeline_mode = #tpu.pipeline_mode<synchronous>, transform_indices = @transform_7, window_bounds = array<i64: 1, 32>}, {pipeline_mode = #tpu.pipeline_mode<synchronous>, transform_indices = @transform_8, window_bounds = array<i64: 1, 32>}, {pipeline_mode = #tpu.pipeline_mode<synchronous>, transform_indices = @transform_9, window_bounds = array<i64: 1, 32>}, {pipeline_mode = #tpu.pipeline_mode<synchronous>, transform_indices = @transform_10, window_bounds = array<i64: 32, 128>}, {pipeline_mode = #tpu.pipeline_mode<synchronous>, transform_indices = @transform_11, window_bounds = array<i64: 1, 128>}, {pipeline_mode = #tpu.pipeline_mode<synchronous>, transform_indices = @transform_12, window_bounds = array<i64: 128, 32>}, {pipeline_mode = #tpu.pipeline_mode<synchronous>, transform_indices = @transform_13, window_bounds = array<i64: 1, 32>}, {transform_indices = @transform_14, window_bounds = array<i64: 1, 8, 32>}]} {
    %c0 = arith.constant 0 : index
    %c0_0 = arith.constant 0 : index
    %c0_1 = arith.constant 0 : index
    %0 = vector.load %arg2[%c0, %c0_0, %c0_1] : memref<1x8x32xf32, #tpu.memory_space<vmem>>, vector<1x8x32xf32>
    %1 = vector.shape_cast %0 : vector<1x8x32xf32> to vector<8x32xf32>
    %c0_2 = arith.constant 0 : index
    %c0_3 = arith.constant 0 : index
    %2 = vector.load %arg3[%c0_2, %c0_3] : memref<1x32xf32, #tpu.memory_space<vmem>>, vector<1x32xf32>
    %c0_4 = arith.constant 0 : index
    %c0_5 = arith.constant 0 : index
    %3 = vector.load %arg4[%c0_4, %c0_5] : memref<1x32xf32, #tpu.memory_space<vmem>>, vector<1x32xf32>
    %cst = arith.constant dense<0.000000e+00> : vector<8xf32>
    %4 = vector.multi_reduction <add>, %1, %cst [1] : vector<8x32xf32> to vector<8xf32>
    %5 = vector.shape_cast %4 : vector<8xf32> to vector<8x1xf32>
    %cst_6 = arith.constant 3.200000e+01 : f32
    %6 = vector.broadcast %cst_6 : f32 to vector<8x1xf32>
    %7 = arith.divf %5, %6 : vector<8x1xf32>
    %8 = vector.broadcast %7 : vector<8x1xf32> to vector<8x32xf32>
    %9 = arith.subf %1, %8 : vector<8x32xf32>
    %10 = arith.mulf %9, %9 : vector<8x32xf32>
    %cst_7 = arith.constant dense<0.000000e+00> : vector<8xf32>
    %11 = vector.multi_reduction <add>, %10, %cst_7 [1] : vector<8x32xf32> to vector<8xf32>
    %12 = vector.shape_cast %11 : vector<8xf32> to vector<8x1xf32>
    %cst_8 = arith.constant 3.200000e+01 : f32
    %13 = vector.broadcast %cst_8 : f32 to vector<8x1xf32>
    %14 = arith.divf %12, %13 : vector<8x1xf32>
    %15 = vector.broadcast %7 : vector<8x1xf32> to vector<8x32xf32>
    %16 = arith.subf %1, %15 : vector<8x32xf32>
    %cst_9 = arith.constant 9.99999974E-6 : f32
    %17 = vector.broadcast %cst_9 : f32 to vector<8x1xf32>
    %18 = arith.addf %14, %17 : vector<8x1xf32>
    %19 = math.rsqrt %18 : vector<8x1xf32>
    %20 = vector.broadcast %19 : vector<8x1xf32> to vector<8x32xf32>
    %21 = arith.mulf %16, %20 : vector<8x32xf32>
    %22 = vector.broadcast %2 : vector<1x32xf32> to vector<8x32xf32>
    %23 = arith.mulf %21, %22 : vector<8x32xf32>
    %24 = vector.broadcast %3 : vector<1x32xf32> to vector<8x32xf32>
    %25 = arith.addf %23, %24 : vector<8x32xf32>
    %26 = arith.truncf %25 : vector<8x32xf32> to vector<8x32xbf16>
    %c0_10 = arith.constant 0 : index
    %c0_11 = arith.constant 0 : index
    %27 = vector.load %arg5[%c0_10, %c0_11] : memref<32x32xbf16, #tpu.memory_space<vmem>>, vector<32x32xbf16>
    %cst_12 = arith.constant dense<0.000000e+00> : vector<8x32xf32>
    %28 = tpu.matmul %26, %27, %cst_12 {dimension_numbers = #tpu.dot_dimension_numbers<[1], [0], [0], [1], [0, 0, 1, 1], [], []>} : vector<8x32xbf16>, vector<32x32xbf16>, vector<8x32xf32> -> vector<8x32xf32>
    %cst_13 = arith.constant 0.176776692 : f32
    %29 = vector.broadcast %cst_13 : f32 to vector<8x32xf32>
    %30 = arith.mulf %28, %29 : vector<8x32xf32>
    %31 = arith.truncf %25 : vector<8x32xf32> to vector<8x32xbf16>
    %c0_14 = arith.constant 0 : index
    %c0_15 = arith.constant 0 : index
    %32 = vector.load %arg6[%c0_14, %c0_15] : memref<32x32xbf16, #tpu.memory_space<vmem>>, vector<32x32xbf16>
    %cst_16 = arith.constant dense<0.000000e+00> : vector<8x32xf32>
    %33 = tpu.matmul %31, %32, %cst_16 {dimension_numbers = #tpu.dot_dimension_numbers<[1], [0], [0], [1], [0, 0, 1, 1], [], []>} : vector<8x32xbf16>, vector<32x32xbf16>, vector<8x32xf32> -> vector<8x32xf32>
    %34 = arith.truncf %25 : vector<8x32xf32> to vector<8x32xbf16>
    %c0_17 = arith.constant 0 : index
    %c0_18 = arith.constant 0 : index
    %35 = vector.load %arg7[%c0_17, %c0_18] : memref<32x32xbf16, #tpu.memory_space<vmem>>, vector<32x32xbf16>
    %cst_19 = arith.constant dense<0.000000e+00> : vector<8x32xf32>
    %36 = tpu.matmul %34, %35, %cst_19 {dimension_numbers = #tpu.dot_dimension_numbers<[1], [0], [0], [1], [0, 0, 1, 1], [], []>} : vector<8x32xbf16>, vector<32x32xbf16>, vector<8x32xf32> -> vector<8x32xf32>
    %37 = tpu.iota {dimensions = array<i32: 0>} : vector<8x8xi32>
    %c0_i32 = arith.constant 0 : i32
    %38 = vector.broadcast %c0_i32 : i32 to vector<8x8xi32>
    %39 = arith.addi %38, %37 : vector<8x8xi32>
    %40 = tpu.iota {dimensions = array<i32: 1>} : vector<8x8xi32>
    %41 = arith.cmpi sge, %39, %40 : vector<8x8xi32>
    %42 = vector.extract_strided_slice %30 {offsets = [0, 0], sizes = [8, 8], strides = [1, 1]} : vector<8x32xf32> to vector<8x8xf32>
    %43 = arith.truncf %42 : vector<8x8xf32> to vector<8x8xbf16>
    %44 = vector.extract_strided_slice %33 {offsets = [0, 0], sizes = [8, 8], strides = [1, 1]} : vector<8x32xf32> to vector<8x8xf32>
    %45 = arith.truncf %44 : vector<8x8xf32> to vector<8x8xbf16>
    %46 = vector.extract_strided_slice %36 {offsets = [0, 0], sizes = [8, 8], strides = [1, 1]} : vector<8x32xf32> to vector<8x8xf32>
    %47 = arith.truncf %46 : vector<8x8xf32> to vector<8x8xbf16>
    %cst_20 = arith.constant dense<0.000000e+00> : vector<8x8xf32>
    %48 = tpu.matmul %43, %45, %cst_20 {dimension_numbers = #tpu.dot_dimension_numbers<[1], [1], [0], [0], [0, 0, 1, 0], [], []>} : vector<8x8xbf16>, vector<8x8xbf16>, vector<8x8xf32> -> vector<8x8xf32>
    %cst_21 = arith.constant -1.000000e+30 : f32
    %49 = vector.broadcast %cst_21 : f32 to vector<8x8xf32>
    %50 = arith.select %41, %48, %49 : vector<8x8xi1>, vector<8x8xf32>
    %cst_22 = arith.constant dense<0xFF800000> : vector<8xf32>
    %51 = vector.multi_reduction <maximumf>, %50, %cst_22 [1] : vector<8x8xf32> to vector<8xf32>
    %52 = vector.shape_cast %51 : vector<8xf32> to vector<8x1xf32>
    %53 = vector.broadcast %52 : vector<8x1xf32> to vector<8x8xf32>
    %54 = arith.subf %50, %53 : vector<8x8xf32>
    %55 = math.exp %54 : vector<8x8xf32>
    %cst_23 = arith.constant dense<0.000000e+00> : vector<8xf32>
    %56 = vector.multi_reduction <add>, %55, %cst_23 [1] : vector<8x8xf32> to vector<8xf32>
    %57 = vector.shape_cast %56 : vector<8xf32> to vector<8x1xf32>
    %58 = tpu.reciprocal %57 {approx = true} : vector<8x1xf32> -> vector<8x1xf32>
    %59 = vector.broadcast %58 : vector<8x1xf32> to vector<8x8xf32>
    %60 = arith.mulf %55, %59 : vector<8x8xf32>
    %61 = arith.truncf %60 : vector<8x8xf32> to vector<8x8xbf16>
    %cst_24 = arith.constant dense<0.000000e+00> : vector<8x8xf32>
    %62 = tpu.matmul %61, %47, %cst_24 {dimension_numbers = #tpu.dot_dimension_numbers<[1], [0], [0], [1], [0, 0, 1, 1], [], []>} : vector<8x8xbf16>, vector<8x8xbf16>, vector<8x8xf32> -> vector<8x8xf32>
    %c0_25 = arith.constant 0 : index
    %c0_26 = arith.constant 0 : index
    %63 = vector.load %arg17[%c0_25, %c0_26] : memref<8x32xf32, #tpu.memory_space<vmem>>, vector<8x8xf32>
    tpu.vector_store %arg17[%c0_25, %c0_26], %62 {strides = array<i32>} : memref<8x32xf32, #tpu.memory_space<vmem>>, vector<8x8xf32>,
    %64 = vector.extract_strided_slice %30 {offsets = [0, 8], sizes = [8, 8], strides = [1, 1]} : vector<8x32xf32> to vector<8x8xf32>
    %65 = arith.truncf %64 : vector<8x8xf32> to vector<8x8xbf16>
    %66 = vector.extract_strided_slice %33 {offsets = [0, 8], sizes = [8, 8], strides = [1, 1]} : vector<8x32xf32> to vector<8x8xf32>
    %67 = arith.truncf %66 : vector<8x8xf32> to vector<8x8xbf16>
    %68 = vector.extract_strided_slice %36 {offsets = [0, 8], sizes = [8, 8], strides = [1, 1]} : vector<8x32xf32> to vector<8x8xf32>
    %69 = arith.truncf %68 : vector<8x8xf32> to vector<8x8xbf16>
    %cst_27 = arith.constant dense<0.000000e+00> : vector<8x8xf32>
    %70 = tpu.matmul %65, %67, %cst_27 {dimension_numbers = #tpu.dot_dimension_numbers<[1], [1], [0], [0], [0, 0, 1, 0], [], []>} : vector<8x8xbf16>, vector<8x8xbf16>, vector<8x8xf32> -> vector<8x8xf32>
    %cst_28 = arith.constant -1.000000e+30 : f32
    %71 = vector.broadcast %cst_28 : f32 to vector<8x8xf32>
    %72 = arith.select %41, %70, %71 : vector<8x8xi1>, vector<8x8xf32>
    %cst_29 = arith.constant dense<0xFF800000> : vector<8xf32>
    %73 = vector.multi_reduction <maximumf>, %72, %cst_29 [1] : vector<8x8xf32> to vector<8xf32>
    %74 = vector.shape_cast %73 : vector<8xf32> to vector<8x1xf32>
    %75 = vector.broadcast %74 : vector<8x1xf32> to vector<8x8xf32>
    %76 = arith.subf %72, %75 : vector<8x8xf32>
    %77 = math.exp %76 : vector<8x8xf32>
    %cst_30 = arith.constant dense<0.000000e+00> : vector<8xf32>
    %78 = vector.multi_reduction <add>, %77, %cst_30 [1] : vector<8x8xf32> to vector<8xf32>
    %79 = vector.shape_cast %78 : vector<8xf32> to vector<8x1xf32>
    %80 = tpu.reciprocal %79 {approx = true} : vector<8x1xf32> -> vector<8x1xf32>
    %81 = vector.broadcast %80 : vector<8x1xf32> to vector<8x8xf32>
    %82 = arith.mulf %77, %81 : vector<8x8xf32>
    %83 = arith.truncf %82 : vector<8x8xf32> to vector<8x8xbf16>
    %cst_31 = arith.constant dense<0.000000e+00> : vector<8x8xf32>
    %84 = tpu.matmul %83, %69, %cst_31 {dimension_numbers = #tpu.dot_dimension_numbers<[1], [0], [0], [1], [0, 0, 1, 1], [], []>} : vector<8x8xbf16>, vector<8x8xbf16>, vector<8x8xf32> -> vector<8x8xf32>
    %c0_32 = arith.constant 0 : index
    %c8 = arith.constant 8 : index
    %85 = vector.load %arg17[%c0_32, %c8] : memref<8x32xf32, #tpu.memory_space<vmem>>, vector<8x8xf32>
    tpu.vector_store %arg17[%c0_32, %c8], %84 {strides = array<i32>} : memref<8x32xf32, #tpu.memory_space<vmem>>, vector<8x8xf32>,
    %86 = vector.extract_strided_slice %30 {offsets = [0, 16], sizes = [8, 8], strides = [1, 1]} : vector<8x32xf32> to vector<8x8xf32>
    %87 = arith.truncf %86 : vector<8x8xf32> to vector<8x8xbf16>
    %88 = vector.extract_strided_slice %33 {offsets = [0, 16], sizes = [8, 8], strides = [1, 1]} : vector<8x32xf32> to vector<8x8xf32>
    %89 = arith.truncf %88 : vector<8x8xf32> to vector<8x8xbf16>
    %90 = vector.extract_strided_slice %36 {offsets = [0, 16], sizes = [8, 8], strides = [1, 1]} : vector<8x32xf32> to vector<8x8xf32>
    %91 = arith.truncf %90 : vector<8x8xf32> to vector<8x8xbf16>
    %cst_33 = arith.constant dense<0.000000e+00> : vector<8x8xf32>
    %92 = tpu.matmul %87, %89, %cst_33 {dimension_numbers = #tpu.dot_dimension_numbers<[1], [1], [0], [0], [0, 0, 1, 0], [], []>} : vector<8x8xbf16>, vector<8x8xbf16>, vector<8x8xf32> -> vector<8x8xf32>
    %cst_34 = arith.constant -1.000000e+30 : f32
    %93 = vector.broadcast %cst_34 : f32 to vector<8x8xf32>
    %94 = arith.select %41, %92, %93 : vector<8x8xi1>, vector<8x8xf32>
    %cst_35 = arith.constant dense<0xFF800000> : vector<8xf32>
    %95 = vector.multi_reduction <maximumf>, %94, %cst_35 [1] : vector<8x8xf32> to vector<8xf32>
    %96 = vector.shape_cast %95 : vector<8xf32> to vector<8x1xf32>
    %97 = vector.broadcast %96 : vector<8x1xf32> to vector<8x8xf32>
    %98 = arith.subf %94, %97 : vector<8x8xf32>
    %99 = math.exp %98 : vector<8x8xf32>
    %cst_36 = arith.constant dense<0.000000e+00> : vector<8xf32>
    %100 = vector.multi_reduction <add>, %99, %cst_36 [1] : vector<8x8xf32> to vector<8xf32>
    %101 = vector.shape_cast %100 : vector<8xf32> to vector<8x1xf32>
    %102 = tpu.reciprocal %101 {approx = true} : vector<8x1xf32> -> vector<8x1xf32>
    %103 = vector.broadcast %102 : vector<8x1xf32> to vector<8x8xf32>
    %104 = arith.mulf %99, %103 : vector<8x8xf32>
    %105 = arith.truncf %104 : vector<8x8xf32> to vector<8x8xbf16>
    %cst_37 = arith.constant dense<0.000000e+00> : vector<8x8xf32>
    %106 = tpu.matmul %105, %91, %cst_37 {dimension_numbers = #tpu.dot_dimension_numbers<[1], [0], [0], [1], [0, 0, 1, 1], [], []>} : vector<8x8xbf16>, vector<8x8xbf16>, vector<8x8xf32> -> vector<8x8xf32>
    %c0_38 = arith.constant 0 : index
    %c16 = arith.constant 16 : index
    %107 = vector.load %arg17[%c0_38, %c16] : memref<8x32xf32, #tpu.memory_space<vmem>>, vector<8x8xf32>
    tpu.vector_store %arg17[%c0_38, %c16], %106 {strides = array<i32>} : memref<8x32xf32, #tpu.memory_space<vmem>>, vector<8x8xf32>,
    %108 = vector.extract_strided_slice %30 {offsets = [0, 24], sizes = [8, 8], strides = [1, 1]} : vector<8x32xf32> to vector<8x8xf32>
    %109 = arith.truncf %108 : vector<8x8xf32> to vector<8x8xbf16>
    %110 = vector.extract_strided_slice %33 {offsets = [0, 24], sizes = [8, 8], strides = [1, 1]} : vector<8x32xf32> to vector<8x8xf32>
    %111 = arith.truncf %110 : vector<8x8xf32> to vector<8x8xbf16>
    %112 = vector.extract_strided_slice %36 {offsets = [0, 24], sizes = [8, 8], strides = [1, 1]} : vector<8x32xf32> to vector<8x8xf32>
    %113 = arith.truncf %112 : vector<8x8xf32> to vector<8x8xbf16>
    %cst_39 = arith.constant dense<0.000000e+00> : vector<8x8xf32>
    %114 = tpu.matmul %109, %111, %cst_39 {dimension_numbers = #tpu.dot_dimension_numbers<[1], [1], [0], [0], [0, 0, 1, 0], [], []>} : vector<8x8xbf16>, vector<8x8xbf16>, vector<8x8xf32> -> vector<8x8xf32>
    %cst_40 = arith.constant -1.000000e+30 : f32
    %115 = vector.broadcast %cst_40 : f32 to vector<8x8xf32>
    %116 = arith.select %41, %114, %115 : vector<8x8xi1>, vector<8x8xf32>
    %cst_41 = arith.constant dense<0xFF800000> : vector<8xf32>
    %117 = vector.multi_reduction <maximumf>, %116, %cst_41 [1] : vector<8x8xf32> to vector<8xf32>
    %118 = vector.shape_cast %117 : vector<8xf32> to vector<8x1xf32>
    %119 = vector.broadcast %118 : vector<8x1xf32> to vector<8x8xf32>
    %120 = arith.subf %116, %119 : vector<8x8xf32>
    %121 = math.exp %120 : vector<8x8xf32>
    %cst_42 = arith.constant dense<0.000000e+00> : vector<8xf32>
    %122 = vector.multi_reduction <add>, %121, %cst_42 [1] : vector<8x8xf32> to vector<8xf32>
    %123 = vector.shape_cast %122 : vector<8xf32> to vector<8x1xf32>
    %124 = tpu.reciprocal %123 {approx = true} : vector<8x1xf32> -> vector<8x1xf32>
    %125 = vector.broadcast %124 : vector<8x1xf32> to vector<8x8xf32>
    %126 = arith.mulf %121, %125 : vector<8x8xf32>
    %127 = arith.truncf %126 : vector<8x8xf32> to vector<8x8xbf16>
    %cst_43 = arith.constant dense<0.000000e+00> : vector<8x8xf32>
    %128 = tpu.matmul %127, %113, %cst_43 {dimension_numbers = #tpu.dot_dimension_numbers<[1], [0], [0], [1], [0, 0, 1, 1], [], []>} : vector<8x8xbf16>, vector<8x8xbf16>, vector<8x8xf32> -> vector<8x8xf32>
    %c0_44 = arith.constant 0 : index
    %c24 = arith.constant 24 : index
    %129 = vector.load %arg17[%c0_44, %c24] : memref<8x32xf32, #tpu.memory_space<vmem>>, vector<8x8xf32>
    tpu.vector_store %arg17[%c0_44, %c24], %128 {strides = array<i32>} : memref<8x32xf32, #tpu.memory_space<vmem>>, vector<8x8xf32>,
    %c0_45 = arith.constant 0 : index
    %c0_46 = arith.constant 0 : index
    %130 = vector.load %arg17[%c0_45, %c0_46] : memref<8x32xf32, #tpu.memory_space<vmem>>, vector<8x32xf32>
    %131 = arith.truncf %130 : vector<8x32xf32> to vector<8x32xbf16>
    %c0_47 = arith.constant 0 : index
    %c0_48 = arith.constant 0 : index
    %132 = vector.load %arg8[%c0_47, %c0_48] : memref<32x32xbf16, #tpu.memory_space<vmem>>, vector<32x32xbf16>
    %cst_49 = arith.constant dense<0.000000e+00> : vector<8x32xf32>
    %133 = tpu.matmul %131, %132, %cst_49 {dimension_numbers = #tpu.dot_dimension_numbers<[1], [0], [0], [1], [0, 0, 1, 1], [], []>} : vector<8x32xbf16>, vector<32x32xbf16>, vector<8x32xf32> -> vector<8x32xf32>
    %c0_50 = arith.constant 0 : index
    %c0_51 = arith.constant 0 : index
    %134 = vector.load %arg9[%c0_50, %c0_51] : memref<1x32xf32, #tpu.memory_space<vmem>>, vector<1x32xf32>
    %135 = vector.broadcast %134 : vector<1x32xf32> to vector<8x32xf32>
    %136 = arith.addf %133, %135 : vector<8x32xf32>
    %137 = arith.addf %1, %136 : vector<8x32xf32>
    %c0_52 = arith.constant 0 : index
    %c0_53 = arith.constant 0 : index
    %138 = vector.load %arg10[%c0_52, %c0_53] : memref<1x32xf32, #tpu.memory_space<vmem>>, vector<1x32xf32>
    %c0_54 = arith.constant 0 : index
    %c0_55 = arith.constant 0 : index
    %139 = vector.load %arg11[%c0_54, %c0_55] : memref<1x32xf32, #tpu.memory_space<vmem>>, vector<1x32xf32>
    %cst_56 = arith.constant dense<0.000000e+00> : vector<8xf32>
    %140 = vector.multi_reduction <add>, %137, %cst_56 [1] : vector<8x32xf32> to vector<8xf32>
    %141 = vector.shape_cast %140 : vector<8xf32> to vector<8x1xf32>
    %cst_57 = arith.constant 3.200000e+01 : f32
    %142 = vector.broadcast %cst_57 : f32 to vector<8x1xf32>
    %143 = arith.divf %141, %142 : vector<8x1xf32>
    %144 = vector.broadcast %143 : vector<8x1xf32> to vector<8x32xf32>
    %145 = arith.subf %137, %144 : vector<8x32xf32>
    %146 = arith.mulf %145, %145 : vector<8x32xf32>
    %cst_58 = arith.constant dense<0.000000e+00> : vector<8xf32>
    %147 = vector.multi_reduction <add>, %146, %cst_58 [1] : vector<8x32xf32> to vector<8xf32>
    %148 = vector.shape_cast %147 : vector<8xf32> to vector<8x1xf32>
    %cst_59 = arith.constant 3.200000e+01 : f32
    %149 = vector.broadcast %cst_59 : f32 to vector<8x1xf32>
    %150 = arith.divf %148, %149 : vector<8x1xf32>
    %151 = vector.broadcast %143 : vector<8x1xf32> to vector<8x32xf32>
    %152 = arith.subf %137, %151 : vector<8x32xf32>
    %cst_60 = arith.constant 9.99999974E-6 : f32
    %153 = vector.broadcast %cst_60 : f32 to vector<8x1xf32>
    %154 = arith.addf %150, %153 : vector<8x1xf32>
    %155 = math.rsqrt %154 : vector<8x1xf32>
    %156 = vector.broadcast %155 : vector<8x1xf32> to vector<8x32xf32>
    %157 = arith.mulf %152, %156 : vector<8x32xf32>
    %158 = vector.broadcast %138 : vector<1x32xf32> to vector<8x32xf32>
    %159 = arith.mulf %157, %158 : vector<8x32xf32>
    %160 = vector.broadcast %139 : vector<1x32xf32> to vector<8x32xf32>
    %161 = arith.addf %159, %160 : vector<8x32xf32>
    %162 = arith.truncf %161 : vector<8x32xf32> to vector<8x32xbf16>
    %c0_61 = arith.constant 0 : index
    %c0_62 = arith.constant 0 : index
    %163 = vector.load %arg12[%c0_61, %c0_62] : memref<32x128xbf16, #tpu.memory_space<vmem>>, vector<32x128xbf16>
    %cst_63 = arith.constant dense<0.000000e+00> : vector<8x128xf32>
    %164 = tpu.matmul %162, %163, %cst_63 {dimension_numbers = #tpu.dot_dimension_numbers<[1], [0], [0], [1], [0, 0, 1, 1], [], []>} : vector<8x32xbf16>, vector<32x128xbf16>, vector<8x128xf32> -> vector<8x128xf32>
    %c0_64 = arith.constant 0 : index
    %c0_65 = arith.constant 0 : index
    %165 = vector.load %arg13[%c0_64, %c0_65] : memref<1x128xf32, #tpu.memory_space<vmem>>, vector<1x128xf32>
    %166 = vector.broadcast %165 : vector<1x128xf32> to vector<8x128xf32>
    %167 = arith.addf %164, %166 : vector<8x128xf32>
    %cst_66 = arith.constant 0.000000e+00 : f32
    %168 = vector.broadcast %cst_66 : f32 to vector<8x128xf32>
    %169 = arith.maximumf %167, %168 : vector<8x128xf32>
    %170 = arith.truncf %169 : vector<8x128xf32> to vector<8x128xbf16>
    %c0_67 = arith.constant 0 : index
    %c0_68 = arith.constant 0 : index
    %171 = vector.load %arg14[%c0_67, %c0_68] : memref<128x32xbf16, #tpu.memory_space<vmem>>, vector<128x32xbf16>
    %cst_69 = arith.constant dense<0.000000e+00> : vector<8x32xf32>
    %172 = tpu.matmul %170, %171, %cst_69 {dimension_numbers = #tpu.dot_dimension_numbers<[1], [0], [0], [1], [0, 0, 1, 1], [], []>} : vector<8x128xbf16>, vector<128x32xbf16>, vector<8x32xf32> -> vector<8x32xf32>
    %c0_70 = arith.constant 0 : index
    %c0_71 = arith.constant 0 : index
    %173 = vector.load %arg15[%c0_70, %c0_71] : memref<1x32xf32, #tpu.memory_space<vmem>>, vector<1x32xf32>
    %174 = vector.broadcast %173 : vector<1x32xf32> to vector<8x32xf32>
    %175 = arith.addf %172, %174 : vector<8x32xf32>
    %176 = arith.addf %137, %175 : vector<8x32xf32>
    %c0_72 = arith.constant 0 : index
    %c0_73 = arith.constant 0 : index
    %c0_74 = arith.constant 0 : index
    %177 = vector.load %arg16[%c0_72, %c0_73, %c0_74] : memref<1x8x32xf32, #tpu.memory_space<vmem>>, vector<1x8x32xf32>
    %178 = vector.shape_cast %177 : vector<1x8x32xf32> to vector<8x32xf32>
    %179 = vector.shape_cast %176 : vector<8x32xf32> to vector<1x8x32xf32>
    tpu.vector_store %arg16[%c0_72, %c0_73, %c0_74], %179 {strides = array<i32>} : memref<1x8x32xf32, #tpu.memory_space<vmem>>, vector<1x8x32xf32>,
    return
  }
  func.func @transform_0(%arg0: i32, %arg1: i32) -> (i32, i32, i32) {
    %c0_i32 = arith.constant 0 : i32
    %c0_i32_0 = arith.constant 0 : i32
    %c0_i32_1 = arith.constant 0 : i32
    return %arg0, %c0_i32, %c0_i32_0 : i32, i32, i32
  }
  func.func @transform_1(%arg0: i32, %arg1: i32) -> (i32, i32) {
    %c0_i32 = arith.constant 0 : i32
    %c0_i32_0 = arith.constant 0 : i32
    %c0_i32_1 = arith.constant 0 : i32
    return %c0_i32, %c0_i32_0 : i32, i32
  }
  func.func @transform_2(%arg0: i32, %arg1: i32) -> (i32, i32) {
    %c0_i32 = arith.constant 0 : i32
    %c0_i32_0 = arith.constant 0 : i32
    %c0_i32_1 = arith.constant 0 : i32
    return %c0_i32, %c0_i32_0 : i32, i32
  }
  func.func @transform_3(%arg0: i32, %arg1: i32) -> (i32, i32) {
    %c0_i32 = arith.constant 0 : i32
    %c0_i32_0 = arith.constant 0 : i32
    %c0_i32_1 = arith.constant 0 : i32
    return %c0_i32, %c0_i32_0 : i32, i32
  }
  func.func @transform_4(%arg0: i32, %arg1: i32) -> (i32, i32) {
    %c0_i32 = arith.constant 0 : i32
    %c0_i32_0 = arith.constant 0 : i32
    %c0_i32_1 = arith.constant 0 : i32
    return %c0_i32, %c0_i32_0 : i32, i32
  }
  func.func @transform_5(%arg0: i32, %arg1: i32) -> (i32, i32) {
    %c0_i32 = arith.constant 0 : i32
    %c0_i32_0 = arith.constant 0 : i32
    %c0_i32_1 = arith.constant 0 : i32
    return %c0_i32, %c0_i32_0 : i32, i32
  }
  func.func @transform_6(%arg0: i32, %arg1: i32) -> (i32, i32) {
    %c0_i32 = arith.constant 0 : i32
    %c0_i32_0 = arith.constant 0 : i32
    %c0_i32_1 = arith.constant 0 : i32
    return %c0_i32, %c0_i32_0 : i32, i32
  }
  func.func @transform_7(%arg0: i32, %arg1: i32) -> (i32, i32) {
    %c0_i32 = arith.constant 0 : i32
    %c0_i32_0 = arith.constant 0 : i32
    %c0_i32_1 = arith.constant 0 : i32
    return %c0_i32, %c0_i32_0 : i32, i32
  }
  func.func @transform_8(%arg0: i32, %arg1: i32) -> (i32, i32) {
    %c0_i32 = arith.constant 0 : i32
    %c0_i32_0 = arith.constant 0 : i32
    %c0_i32_1 = arith.constant 0 : i32
    return %c0_i32, %c0_i32_0 : i32, i32
  }
  func.func @transform_9(%arg0: i32, %arg1: i32) -> (i32, i32) {
    %c0_i32 = arith.constant 0 : i32
    %c0_i32_0 = arith.constant 0 : i32
    %c0_i32_1 = arith.constant 0 : i32
    return %c0_i32, %c0_i32_0 : i32, i32
  }
  func.func @transform_10(%arg0: i32, %arg1: i32) -> (i32, i32) {
    %c0_i32 = arith.constant 0 : i32
    %c0_i32_0 = arith.constant 0 : i32
    %c0_i32_1 = arith.constant 0 : i32
    return %c0_i32, %c0_i32_0 : i32, i32
  }
  func.func @transform_11(%arg0: i32, %arg1: i32) -> (i32, i32) {
    %c0_i32 = arith.constant 0 : i32
    %c0_i32_0 = arith.constant 0 : i32
    %c0_i32_1 = arith.constant 0 : i32
    return %c0_i32, %c0_i32_0 : i32, i32
  }
  func.func @transform_12(%arg0: i32, %arg1: i32) -> (i32, i32) {
    %c0_i32 = arith.constant 0 : i32
    %c0_i32_0 = arith.constant 0 : i32
    %c0_i32_1 = arith.constant 0 : i32
    return %c0_i32, %c0_i32_0 : i32, i32
  }
  func.func @transform_13(%arg0: i32, %arg1: i32) -> (i32, i32) {
    %c0_i32 = arith.constant 0 : i32
    %c0_i32_0 = arith.constant 0 : i32
    %c0_i32_1 = arith.constant 0 : i32
    return %c0_i32, %c0_i32_0 : i32, i32
  }
  func.func @transform_14(%arg0: i32, %arg1: i32) -> (i32, i32, i32) {
    %c0_i32 = arith.constant 0 : i32
    %c0_i32_0 = arith.constant 0 : i32
    return %arg0, %arg1, %c0_i32 : i32, i32, i32
  }
}

</mosaic_0001>

<llo_original>
// kernel: tpu_custom_call.1
$region0: #{tpu_custom_call.1}
  #allocation0 [shape = 'u32[]', space=smem, size = 0x4, offset = 0x4, fixed_abs, tag = 'smem constant byte address 0x4 - core index']
  #allocation1 [shape = 'u32[144,128]{1,0:T(1,128)}', space=vmem, size = 0x12000, scoped, tag = 'internal scratch']
  #allocation2 [shape = 'f32[8,32]{1,0:T(8,128)}', space=vmem, size = 0x1000, scoped, tag = 'scratch operand']
  %s0 = inlined_call_operand.vmem [shape: f32[2,8,32], index: 0, kind: input, shape index: {}]
  %s1 = inlined_call_operand.vmem [shape: f32[1,32], index: 1, kind: input, shape index: {}]
  %s2 = inlined_call_operand.vmem [shape: f32[1,32], index: 2, kind: input, shape index: {}]
  %s3 = inlined_call_operand.vmem [shape: bf16[32,32], index: 3, kind: input, shape index: {}]
  %s4 = inlined_call_operand.vmem [shape: bf16[32,32], index: 4, kind: input, shape index: {}]
  %s5 = inlined_call_operand.vmem [shape: bf16[32,32], index: 5, kind: input, shape index: {}]
  %s6 = inlined_call_operand.vmem [shape: bf16[32,32], index: 6, kind: input, shape index: {}]
  %s7 = inlined_call_operand.vmem [shape: f32[1,32], index: 7, kind: input, shape index: {}]
  %s8 = inlined_call_operand.vmem [shape: f32[1,32], index: 8, kind: input, shape index: {}]
  %s9 = inlined_call_operand.vmem [shape: f32[1,32], index: 9, kind: input, shape index: {}]
  %s10 = inlined_call_operand.hbm [shape: bf16[32,128], index: 10, kind: input, shape index: {}]
  %s11 = inlined_call_operand.hbm [shape: f32[1,128], index: 11, kind: input, shape index: {}]
  %s12 = inlined_call_operand.vmem [shape: bf16[128,32], index: 12, kind: input, shape index: {}]
  %s13 = inlined_call_operand.vmem [shape: f32[1,32], index: 13, kind: input, shape index: {}]
  %s14 = inlined_call_operand.hbm [shape: f32[2,8,32], index: 14, kind: output, shape index: {}]
  %s15 = sld [smem:[#allocation0]]
  $region97: #{tpu_custom_call.1} parent=0
    _
  %s17 = ssub.s32 1, %s15
  %s18 = scalar_select 0, %s17, %s15
  $region1: #{tpu_custom_call.1} parent=0
    #allocation3 [shape = 'u8[8192]{0}', space=vmem, size = 0x2000, scoped, tag = 'input window, operand 10, single buffered']
    #allocation4 [shape = 's32[2]{0}', space=sflag, size = 0x8, scoped, tag = 'scoped memory for tpu_custom_call.1']
    #allocation5 [shape = 's32[2]{0}', space=sflag, size = 0x8, scoped, tag = 'scoped memory for tpu_custom_call.1']
    #allocation6 [shape = 'u8[512]{0}', space=vmem, size = 0x400, scoped, tag = 'input window, operand 11, single buffered']
    #allocation7 [shape = 's32[1]{0}', space=sflag, size = 0x4, scoped, tag = 'scoped memory for tpu_custom_call.1']
    #allocation8 [shape = 'u8[8192]{0}', space=vmem, size = 0x2000, scoped, tag = 'output window, operand 0']
    %19 = vsyncpa [#allocation4], 0
    %20 = vsyncpa [#allocation7], 0
    %21 = vsyncpa [#allocation5], 0
    %s22 = scalar_lea.sflag [#allocation5], 1
    %23 = vsyncpa %s22, 0
    loop: start=0, step=1, limit=4
    $region2: #{tpu_custom_call.1} parent=1 // loop_pre_header
      _
    $region3: #{tpu_custom_call.1} parent=1 // loop_header
      %s25 = sphi 0, %s29
      %p26 = scmp.ge.s32.totalorder %s25, 4
      %s32 = sphi 0, %s44
      %s33 = sphi 0, %s40
      %s34 = sphi 0, %s32
      %s35 = sphi 0, %s33
      %s36 = sphi 0, %s34
      %s37 = sphi 0, %s35
      %s47 = sphi 0, %s49
      %s50 = sphi 0, %s47
      %s51 = sphi 0, %s50
      %s67 = sphi 0, %s51
      %s71 = sphi 0, %s71
      %s73 = sphi 0, %s71
      %s74 = sphi 0, %s73
      %s88 = sphi 0, %s74
      %s92 = sphi 0, %s92
      %s94 = sphi 0, %s92
      %s95 = sphi 0, %s94
      %s109 = sphi 0, %s95
      %s113 = sphi 0, %s113
      %s115 = sphi 0, %s113
      %s116 = sphi 0, %s115
      %s130 = sphi 0, %s116
      %s134 = sphi 0, %s134
      %s136 = sphi 0, %s134
      %s137 = sphi 0, %s136
      %s151 = sphi 0, %s137
      %s155 = sphi 0, %s155
      %s157 = sphi 0, %s155
      %s158 = sphi 0, %s157
      %s172 = sphi 0, %s158
      %s176 = sphi 0, %s176
      %s178 = sphi 0, %s176
      %s179 = sphi 0, %s178
      %s193 = sphi 0, %s179
      %s197 = sphi 0, %s197
      %s199 = sphi 0, %s197
      %s200 = sphi 0, %s199
      %s214 = sphi 0, %s200
      %s218 = sphi 0, %s218
      %s220 = sphi 0, %s218
      %s221 = sphi 0, %s220
      %s235 = sphi 0, %s221
      %s239 = sphi 0, %s239
      %s241 = sphi 0, %s239
      %s242 = sphi 0, %s241
      %s256 = sphi 0, %s242
      %s260 = sphi 0, %s260
      %s262 = sphi 0, %s260
      %s263 = sphi 0, %s262
      %s277 = sphi 0, %s263
      %s281 = sphi 0, %s281
      %s283 = sphi 0, %s281
      %s284 = sphi 0, %s283
      %s298 = sphi 0, %s284
      %s302 = sphi 0, %s302
      %s304 = sphi 0, %s302
      %s305 = sphi 0, %s304
      %s319 = sphi 0, %s305
      %s323 = sphi 0, %s323
      %s325 = sphi 0, %s323
      %s326 = sphi 0, %s325
      %s340 = sphi 0, %s326
      %s348 = sphi 0, %s350
      %s351 = sphi 0, %s348
      %s352 = sphi 0, %s351
      %s368 = sphi 0, %s352
    $region4: #{tpu_custom_call.1} parent=1 // loop_header_branch
      %28 = sbr.rel (%p26) target = $region8
    $region5: #{tpu_custom_call.1} parent=1 // loop_body
      %s30 = ssub.s32 %s25, 1
      %s31 = ssub.s32 %s25, 2
      %s38 = sadd.s32 1, %s33
      %p39 = scmp.ge.s32.totalorder %s38, 1
      %s40 = scalar_select %p39, 0, %s38
      %s41 = sadd.s32 1, %s32
      %s42 = scalar_select %p39, %s41, %s32
      %p43 = scmp.ge.s32.totalorder %s42, 2
      %s44 = scalar_select %p43, 0, %s42
      %s45 = ssub.s32 %s32, %s44
      %p46 = scmp.eq.s32.totalorder %s45, 0
      %s48 = sadd.s32 %s47, 1
      %s49 = scalar_select %p46, %s47, %s48
      %p52 = pneg %p46
      %p53 = scmp.eq.s32.totalorder %s25, 1
      %p54 = por %p52, %p53
      %p55 = scmp.ne.s32.totalorder %s47, %s50
      %p56 = scmp.eq.s32.totalorder %s25, 0
      %p57 = por %p55, %p56
      %p58 = scmp.ne.s32.totalorder %s47, %s50
      %p59 = scmp.eq.s32.totalorder %s30, 1
      %p60 = por %p58, %p59
      %p61 = scmp.ne.s32.totalorder %s50, %s51
      %p62 = scmp.eq.s32.totalorder %s30, 0
      %p63 = por %p61, %p62
      %p64 = scmp.ne.s32.totalorder %s50, %s51
      %p65 = scmp.eq.s32.totalorder %s31, 1
      %p66 = por %p64, %p65
      %p68 = scmp.ne.s32.totalorder %s51, %s67
      %p69 = scmp.eq.s32.totalorder %s31, 0
      %p70 = por %p68, %p69
      %s72 = sadd.s32 %s71, 1
      %p75 = scmp.eq.s32.totalorder %s25, 1
      %p76 = scmp.ne.s32.totalorder %s71, %s73
      %p77 = scmp.eq.s32.totalorder %s25, 0
      %p78 = por %p76, %p77
      %p79 = scmp.ne.s32.totalorder %s71, %s73
      %p80 = scmp.eq.s32.totalorder %s30, 1
      %p81 = por %p79, %p80
      %p82 = scmp.ne.s32.totalorder %s73, %s74
      %p83 = scmp.eq.s32.totalorder %s30, 0
      %p84 = por %p82, %p83
      %p85 = scmp.ne.s32.totalorder %s73, %s74
      %p86 = scmp.eq.s32.totalorder %s31, 1
      %p87 = por %p85, %p86
      %p89 = scmp.ne.s32.totalorder %s74, %s88
      %p90 = scmp.eq.s32.totalorder %s31, 0
      %p91 = por %p89, %p90
      %s93 = sadd.s32 %s92, 1
      %p96 = scmp.eq.s32.totalorder %s25, 1
      %p97 = scmp.ne.s32.totalorder %s92, %s94
      %p98 = scmp.eq.s32.totalorder %s25, 0
      %p99 = por %p97, %p98
      %p100 = scmp.ne.s32.totalorder %s92, %s94
      %p101 = scmp.eq.s32.totalorder %s30, 1
      %p102 = por %p100, %p101
      %p103 = scmp.ne.s32.totalorder %s94, %s95
      %p104 = scmp.eq.s32.totalorder %s30, 0
      %p105 = por %p103, %p104
      %p106 = scmp.ne.s32.totalorder %s94, %s95
      %p107 = scmp.eq.s32.totalorder %s31, 1
      %p108 = por %p106, %p107
      %p110 = scmp.ne.s32.totalorder %s95, %s109
      %p111 = scmp.eq.s32.totalorder %s31, 0
      %p112 = por %p110, %p111
      %s114 = sadd.s32 %s113, 1
      %p117 = scmp.eq.s32.totalorder %s25, 1
      %p118 = scmp.ne.s32.totalorder %s113, %s115
      %p119 = scmp.eq.s32.totalorder %s25, 0
      %p120 = por %p118, %p119
      %p121 = scmp.ne.s32.totalorder %s113, %s115
      %p122 = scmp.eq.s32.totalorder %s30, 1
      %p123 = por %p121, %p122
      %p124 = scmp.ne.s32.totalorder %s115, %s116
      %p125 = scmp.eq.s32.totalorder %s30, 0
      %p126 = por %p124, %p125
      %p127 = scmp.ne.s32.totalorder %s115, %s116
      %p128 = scmp.eq.s32.totalorder %s31, 1
      %p129 = por %p127, %p128
      %p131 = scmp.ne.s32.totalorder %s116, %s130
      %p132 = scmp.eq.s32.totalorder %s31, 0
      %p133 = por %p131, %p132
      %s135 = sadd.s32 %s134, 1
      %p138 = scmp.eq.s32.totalorder %s25, 1
      %p139 = scmp.ne.s32.totalorder %s134, %s136
      %p140 = scmp.eq.s32.totalorder %s25, 0
      %p141 = por %p139, %p140
      %p142 = scmp.ne.s32.totalorder %s134, %s136
      %p143 = scmp.eq.s32.totalorder %s30, 1
      %p144 = por %p142, %p143
      %p145 = scmp.ne.s32.totalorder %s136, %s137
      %p146 = scmp.eq.s32.totalorder %s30, 0
      %p147 = por %p145, %p146
      %p148 = scmp.ne.s32.totalorder %s136, %s137
      %p149 = scmp.eq.s32.totalorder %s31, 1
      %p150 = por %p148, %p149
      %p152 = scmp.ne.s32.totalorder %s137, %s151
      %p153 = scmp.eq.s32.totalorder %s31, 0
      %p154 = por %p152, %p153
      %s156 = sadd.s32 %s155, 1
      %p159 = scmp.eq.s32.totalorder %s25, 1
      %p160 = scmp.ne.s32.totalorder %s155, %s157
      %p161 = scmp.eq.s32.totalorder %s25, 0
      %p162 = por %p160, %p161
      %p163 = scmp.ne.s32.totalorder %s155, %s157
      %p164 = scmp.eq.s32.totalorder %s30, 1
      %p165 = por %p163, %p164
      %p166 = scmp.ne.s32.totalorder %s157, %s158
      %p167 = scmp.eq.s32.totalorder %s30, 0
      %p168 = por %p166, %p167
      %p169 = scmp.ne.s32.totalorder %s157, %s158
      %p170 = scmp.eq.s32.totalorder %s31, 1
      %p171 = por %p169, %p170
      %p173 = scmp.ne.s32.totalorder %s158, %s172
      %p174 = scmp.eq.s32.totalorder %s31, 0
      %p175 = por %p173, %p174
      %s177 = sadd.s32 %s176, 1
      %p180 = scmp.eq.s32.totalorder %s25, 1
      %p181 = scmp.ne.s32.totalorder %s176, %s178
      %p182 = scmp.eq.s32.totalorder %s25, 0
      %p183 = por %p181, %p182
      %p184 = scmp.ne.s32.totalorder %s176, %s178
      %p185 = scmp.eq.s32.totalorder %s30, 1
      %p186 = por %p184, %p185
      %p187 = scmp.ne.s32.totalorder %s178, %s179
      %p188 = scmp.eq.s32.totalorder %s30, 0
      %p189 = por %p187, %p188
      %p190 = scmp.ne.s32.totalorder %s178, %s179
      %p191 = scmp.eq.s32.totalorder %s31, 1
      %p192 = por %p190, %p191
      %p194 = scmp.ne.s32.totalorder %s179, %s193
      %p195 = scmp.eq.s32.totalorder %s31, 0
      %p196 = por %p194, %p195
      %s198 = sadd.s32 %s197, 1
      %p201 = scmp.eq.s32.totalorder %s25, 1
      %p202 = scmp.ne.s32.totalorder %s197, %s199
      %p203 = scmp.eq.s32.totalorder %s25, 0
      %p204 = por %p202, %p203
      %p205 = scmp.ne.s32.totalorder %s197, %s199
      %p206 = scmp.eq.s32.totalorder %s30, 1
      %p207 = por %p205, %p206
      %p208 = scmp.ne.s32.totalorder %s199, %s200
      %p209 = scmp.eq.s32.totalorder %s30, 0
      %p210 = por %p208, %p209
      %p211 = scmp.ne.s32.totalorder %s199, %s200
      %p212 = scmp.eq.s32.totalorder %s31, 1
      %p213 = por %p211, %p212
      %p215 = scmp.ne.s32.totalorder %s200, %s214
      %p216 = scmp.eq.s32.totalorder %s31, 0
      %p217 = por %p215, %p216
      %s219 = sadd.s32 %s218, 1
      %p222 = scmp.eq.s32.totalorder %s25, 1
      %p223 = scmp.ne.s32.totalorder %s218, %s220
      %p224 = scmp.eq.s32.totalorder %s25, 0
      %p225 = por %p223, %p224
      %p226 = scmp.ne.s32.totalorder %s218, %s220
      %p227 = scmp.eq.s32.totalorder %s30, 1
      %p228 = por %p226, %p227
      %p229 = scmp.ne.s32.totalorder %s220, %s221
      %p230 = scmp.eq.s32.totalorder %s30, 0
      %p231 = por %p229, %p230
      %p232 = scmp.ne.s32.totalorder %s220, %s221
      %p233 = scmp.eq.s32.totalorder %s31, 1
      %p234 = por %p232, %p233
      %p236 = scmp.ne.s32.totalorder %s221, %s235
      %p237 = scmp.eq.s32.totalorder %s31, 0
      %p238 = por %p236, %p237
      %s240 = sadd.s32 %s239, 1
      %p243 = scmp.eq.s32.totalorder %s25, 1
      %p244 = scmp.ne.s32.totalorder %s239, %s241
      %p245 = scmp.eq.s32.totalorder %s25, 0
      %p246 = por %p244, %p245
      %p247 = scmp.ne.s32.totalorder %s239, %s241
      %p248 = scmp.eq.s32.totalorder %s30, 1
      %p249 = por %p247, %p248
      %p250 = scmp.ne.s32.totalorder %s241, %s242
      %p251 = scmp.eq.s32.totalorder %s30, 0
      %p252 = por %p250, %p251
      %p253 = scmp.ne.s32.totalorder %s241, %s242
      %p254 = scmp.eq.s32.totalorder %s31, 1
      %p255 = por %p253, %p254
      %p257 = scmp.ne.s32.totalorder %s242, %s256
      %p258 = scmp.eq.s32.totalorder %s31, 0
      %p259 = por %p257, %p258
      %s261 = sadd.s32 %s260, 1
      %p264 = scmp.eq.s32.totalorder %s25, 1
      %p265 = scmp.ne.s32.totalorder %s260, %s262
      %p266 = scmp.eq.s32.totalorder %s25, 0
      %p267 = por %p265, %p266
      %p268 = scmp.ne.s32.totalorder %s260, %s262
      %p269 = scmp.eq.s32.totalorder %s30, 1
      %p270 = por %p268, %p269
      %p271 = scmp.ne.s32.totalorder %s262, %s263
      %p272 = scmp.eq.s32.totalorder %s30, 0
      %p273 = por %p271, %p272
      %p274 = scmp.ne.s32.totalorder %s262, %s263
      %p275 = scmp.eq.s32.totalorder %s31, 1
      %p276 = por %p274, %p275
      %p278 = scmp.ne.s32.totalorder %s263, %s277
      %p279 = scmp.eq.s32.totalorder %s31, 0
      %p280 = por %p278, %p279
      %s282 = sadd.s32 %s281, 1
      %p285 = scmp.eq.s32.totalorder %s25, 1
      %p286 = scmp.ne.s32.totalorder %s281, %s283
      %p287 = scmp.eq.s32.totalorder %s25, 0
      %p288 = por %p286, %p287
      %p289 = scmp.ne.s32.totalorder %s281, %s283
      %p290 = scmp.eq.s32.totalorder %s30, 1
      %p291 = por %p289, %p290
      %p292 = scmp.ne.s32.totalorder %s283, %s284
      %p293 = scmp.eq.s32.totalorder %s30, 0
      %p294 = por %p292, %p293
      %p295 = scmp.ne.s32.totalorder %s283, %s284
      %p296 = scmp.eq.s32.totalorder %s31, 1
      %p297 = por %p295, %p296
      %p299 = scmp.ne.s32.totalorder %s284, %s298
      %p300 = scmp.eq.s32.totalorder %s31, 0
      %p301 = por %p299, %p300
      %s303 = sadd.s32 %s302, 1
      %p306 = scmp.eq.s32.totalorder %s25, 1
      %p307 = scmp.ne.s32.totalorder %s302, %s304
      %p308 = scmp.eq.s32.totalorder %s25, 0
      %p309 = por %p307, %p308
      %p310 = scmp.ne.s32.totalorder %s302, %s304
      %p311 = scmp.eq.s32.totalorder %s30, 1
      %p312 = por %p310, %p311
      %p313 = scmp.ne.s32.totalorder %s304, %s305
      %p314 = scmp.eq.s32.totalorder %s30, 0
      %p315 = por %p313, %p314
      %p316 = scmp.ne.s32.totalorder %s304, %s305
      %p317 = scmp.eq.s32.totalorder %s31, 1
      %p318 = por %p316, %p317
      %p320 = scmp.ne.s32.totalorder %s305, %s319
      %p321 = scmp.eq.s32.totalorder %s31, 0
      %p322 = por %p320, %p321
      %s324 = sadd.s32 %s323, 1
      %p327 = scmp.eq.s32.totalorder %s25, 1
      %p328 = scmp.ne.s32.totalorder %s323, %s325
      %p329 = scmp.eq.s32.totalorder %s25, 0
      %p330 = por %p328, %p329
      %p331 = scmp.ne.s32.totalorder %s323, %s325
      %p332 = scmp.eq.s32.totalorder %s30, 1
      %p333 = por %p331, %p332
      %p334 = scmp.ne.s32.totalorder %s325, %s326
      %p335 = scmp.eq.s32.totalorder %s30, 0
      %p336 = por %p334, %p335
      %p337 = scmp.ne.s32.totalorder %s325, %s326
      %p338 = scmp.eq.s32.totalorder %s31, 1
      %p339 = por %p337, %p338
      %p341 = scmp.ne.s32.totalorder %s326, %s340
      %p342 = scmp.eq.s32.totalorder %s31, 0
      %p343 = por %p341, %p342
      %s344 = ssub.s32 %s32, %s44
      %s345 = ssub.s32 %s33, %s40
      %s346 = sor.u32 %s344, %s345
      %p347 = scmp.eq.s32.totalorder %s346, 0
      %s349 = sadd.s32 %s348, 1
      %s350 = scalar_select %p347, %s348, %s349
      %p353 = pneg %p347
      %p354 = scmp.eq.s32.totalorder %s25, 1
      %p355 = por %p353, %p354
      %p356 = scmp.ne.s32.totalorder %s348, %s351
      %p357 = scmp.eq.s32.totalorder %s25, 0
      %p358 = por %p356, %p357
      %p359 = scmp.ne.s32.totalorder %s348, %s351
      %p360 = scmp.eq.s32.totalorder %s30, 1
      %p361 = por %p359, %p360
      %p362 = scmp.ne.s32.totalorder %s351, %s352
      %p363 = scmp.eq.s32.totalorder %s30, 0
      %p364 = por %p362, %p363
      %p365 = scmp.ne.s32.totalorder %s351, %s352
      %p366 = scmp.eq.s32.totalorder %s31, 1
      %p367 = por %p365, %p366
      %p369 = scmp.ne.s32.totalorder %s352, %s368
      %p370 = scmp.eq.s32.totalorder %s31, 0
      %p371 = por %p369, %p370
      %p372 = scmp.le.s32.totalorder 1, %s25
      %p373 = scmp.lt.s32.totalorder %s25, 3
      %p374 = pnand %p372, %p373
      %p375 = pneg %p374
      // Predicated region
      $region9: #{tpu_custom_call.1} parent=5 // pred_check
        _
      $region10: #{tpu_custom_call.1} parent=5 // pred_check_branch
        %377 = sbr.rel (%p374) target = $region12
      $region11: #{tpu_custom_call.1} parent=5 // pred_region
        %s378 = ssub.s32 %s25, 1
        // Predicated region
        $region13: #{tpu_custom_call.1} parent=11 // pred_check
          %p379 = pneg %p84
        $region14: #{tpu_custom_call.1} parent=11 // pred_check_branch
          %381 = sbr.rel (%p379) target = $region16
        $region15: #{tpu_custom_call.1} parent=11 // pred_region
          _
        $region16: #{tpu_custom_call.1} parent=11 // pred_fallthru
          _
        // Predicated region
        $region17: #{tpu_custom_call.1} parent=11 // pred_check
          %p382 = pneg %p105
        $region18: #{tpu_custom_call.1} parent=11 // pred_check_branch
          %384 = sbr.rel (%p382) target = $region20
        $region19: #{tpu_custom_call.1} parent=11 // pred_region
          _
        $region20: #{tpu_custom_call.1} parent=11 // pred_fallthru
          _
        // Predicated region
        $region21: #{tpu_custom_call.1} parent=11 // pred_check
          %p385 = pneg %p126
        $region22: #{tpu_custom_call.1} parent=11 // pred_check_branch
          %387 = sbr.rel (%p385) target = $region24
        $region23: #{tpu_custom_call.1} parent=11 // pred_region
          _
        $region24: #{tpu_custom_call.1} parent=11 // pred_fallthru
          _
        // Predicated region
        $region25: #{tpu_custom_call.1} parent=11 // pred_check
          %p388 = pneg %p147
        $region26: #{tpu_custom_call.1} parent=11 // pred_check_branch
          %390 = sbr.rel (%p388) target = $region28
        $region27: #{tpu_custom_call.1} parent=11 // pred_region
          _
        $region28: #{tpu_custom_call.1} parent=11 // pred_fallthru
          _
        // Predicated region
        $region29: #{tpu_custom_call.1} parent=11 // pred_check
          %p391 = pneg %p168
        $region30: #{tpu_custom_call.1} parent=11 // pred_check_branch
          %393 = sbr.rel (%p391) target = $region32
        $region31: #{tpu_custom_call.1} parent=11 // pred_region
          _
        $region32: #{tpu_custom_call.1} parent=11 // pred_fallthru
          _
        // Predicated region
        $region33: #{tpu_custom_call.1} parent=11 // pred_check
          %p394 = pneg %p189
        $region34: #{tpu_custom_call.1} parent=11 // pred_check_branch
          %396 = sbr.rel (%p394) target = $region36
        $region35: #{tpu_custom_call.1} parent=11 // pred_region
          _
        $region36: #{tpu_custom_call.1} parent=11 // pred_fallthru
          _
        // Predicated region
        $region37: #{tpu_custom_call.1} parent=11 // pred_check
          %p397 = pneg %p210
        $region38: #{tpu_custom_call.1} parent=11 // pred_check_branch
          %399 = sbr.rel (%p397) target = $region40
        $region39: #{tpu_custom_call.1} parent=11 // pred_region
          _
        $region40: #{tpu_custom_call.1} parent=11 // pred_fallthru
          _
        // Predicated region
        $region41: #{tpu_custom_call.1} parent=11 // pred_check
          %p400 = pneg %p231
        $region42: #{tpu_custom_call.1} parent=11 // pred_check_branch
          %402 = sbr.rel (%p400) target = $region44
        $region43: #{tpu_custom_call.1} parent=11 // pred_region
          _
        $region44: #{tpu_custom_call.1} parent=11 // pred_fallthru
          _
        // Predicated region
        $region45: #{tpu_custom_call.1} parent=11 // pred_check
          %p403 = pneg %p252
        $region46: #{tpu_custom_call.1} parent=11 // pred_check_branch
          %405 = sbr.rel (%p403) target = $region48
        $region47: #{tpu_custom_call.1} parent=11 // pred_region
          _
        $region48: #{tpu_custom_call.1} parent=11 // pred_fallthru
          _
        // Predicated region
        $region49: #{tpu_custom_call.1} parent=11 // pred_check
          %p406 = pneg %p273
        $region50: #{tpu_custom_call.1} parent=11 // pred_check_branch
          %408 = sbr.rel (%p406) target = $region52
        $region51: #{tpu_custom_call.1} parent=11 // pred_region
          %s410 = ssub.s32 256, 256
          %411 = vsyncadd [#allocation4], %s410
          %s412 = sshll.u32 [#allocation3], 4
          %s413 = int_to_ptr.vmem [resolvable:$true] %s412
          %418 = dma.hbm_to_vmem [thread:$0]  %s10, 256, %s413, [#allocation4], 64, 64, 4
        $region52: #{tpu_custom_call.1} parent=11 // pred_fallthru
          _
        // Predicated region
        $region53: #{tpu_custom_call.1} parent=11 // pred_check
          %p419 = pneg %p294
        $region54: #{tpu_custom_call.1} parent=11 // pred_check_branch
          %421 = sbr.rel (%p419) target = $region56
        $region55: #{tpu_custom_call.1} parent=11 // pred_region
          %s423 = ssub.s32 16, 16
          %424 = vsyncadd [#allocation7], %s423
          %s426 = sshll.u32 [#allocation6], 4
          %s427 = int_to_ptr.vmem [resolvable:$true] %s426
          %429 = dma.hbm_to_vmem [thread:$0]  %s11, 16, %s427, [#allocation7]
        $region56: #{tpu_custom_call.1} parent=11 // pred_fallthru
          _
        // Predicated region
        $region57: #{tpu_custom_call.1} parent=11 // pred_check
          %p430 = pneg %p315
        $region58: #{tpu_custom_call.1} parent=11 // pred_check_branch
          %432 = sbr.rel (%p430) target = $region60
        $region59: #{tpu_custom_call.1} parent=11 // pred_region
          _
        $region60: #{tpu_custom_call.1} parent=11 // pred_fallthru
          _
        // Predicated region
        $region61: #{tpu_custom_call.1} parent=11 // pred_check
          %p433 = pneg %p336
        $region62: #{tpu_custom_call.1} parent=11 // pred_check_branch
          %435 = sbr.rel (%p433) target = $region64
        $region63: #{tpu_custom_call.1} parent=11 // pred_region
          _
        $region64: #{tpu_custom_call.1} parent=11 // pred_fallthru
          _
      $region12: #{tpu_custom_call.1} parent=5 // pred_fallthru
        _
      %p436 = scmp.lt.s32.totalorder %s25, 2
      // Predicated region
      $region65: #{tpu_custom_call.1} parent=5 // pred_check
        %p437 = pneg %p436
      $region66: #{tpu_custom_call.1} parent=5 // pred_check_branch
        %439 = sbr.rel (%p437) target = $region68
      $region67: #{tpu_custom_call.1} parent=5 // pred_region
        // Predicated region
        $region69: #{tpu_custom_call.1} parent=67 // pred_check
          %p440 = pneg %p57
        $region70: #{tpu_custom_call.1} parent=67 // pred_check_branch
          %442 = sbr.rel (%p440) target = $region72
        $region71: #{tpu_custom_call.1} parent=67 // pred_region
          %p443 = scmp.lt.s32.totalorder %s32, 1
          %s444 = scalar_select %p443, %s32, 1
          %s445 = smul.addr %s444, 8
          %s446 = scalar_lea.vmem %s0, %s445
        $region72: #{tpu_custom_call.1} parent=67 // pred_fallthru
          _
      $region68: #{tpu_custom_call.1} parent=5 // pred_fallthru
        _
      %p447 = scmp.le.s32.totalorder 1, %s25
      %p448 = scmp.lt.s32.totalorder %s25, 3
      %p449 = pnand %p447, %p448
      %p450 = pneg %p449
      // Predicated region
      $region73: #{tpu_custom_call.1} parent=5 // pred_check
        _
      $region74: #{tpu_custom_call.1} parent=5 // pred_check_branch
        %452 = sbr.rel (%p449) target = $region76
      $region75: #{tpu_custom_call.1} parent=5 // pred_region
        %s453 = ssub.s32 %s25, 1
        // Predicated region
        $region77: #{tpu_custom_call.1} parent=75 // pred_check
          %p454 = pneg %p273
        $region78: #{tpu_custom_call.1} parent=75 // pred_check_branch
          %456 = sbr.rel (%p454) target = $region80
        $region79: #{tpu_custom_call.1} parent=75 // pred_region
          %457 = dma.done [#allocation4], 256
        $region80: #{tpu_custom_call.1} parent=75 // pred_fallthru
          _
        // Predicated region
        $region81: #{tpu_custom_call.1} parent=75 // pred_check
          %p458 = pneg %p294
        $region82: #{tpu_custom_call.1} parent=75 // pred_check_branch
          %460 = sbr.rel (%p458) target = $region84
        $region83: #{tpu_custom_call.1} parent=75 // pred_region
          %461 = dma.done [#allocation7], 16
        $region84: #{tpu_custom_call.1} parent=75 // pred_fallthru
          _
        %p462 = scmp.lt.s32.totalorder %s34, 1
        %s463 = scalar_select %p462, %s34, 1
        %s464 = smul.addr %s463, 8
        %s465 = scalar_lea.vmem %s0, %s464
        %p466 = pneg %p63
        %p467 = pneg %p60
        %p468 = pneg %p84
        %p469 = pneg %p81
        %p470 = pneg %p105
        %p471 = pneg %p102
        %p472 = pneg %p126
        %p473 = pneg %p123
        %p474 = pneg %p147
        %p475 = pneg %p144
        %p476 = pneg %p168
        %p477 = pneg %p165
        %p478 = pneg %p189
        %p479 = pneg %p186
        %p480 = pneg %p210
        %p481 = pneg %p207
        %p482 = pneg %p231
        %p483 = pneg %p228
        %p484 = pneg %p252
        %p485 = pneg %p249
        %p486 = pneg %p273
        %p487 = pneg %p270
        %p488 = pneg %p294
        %p489 = pneg %p291
        %p490 = pneg %p315
        %p491 = pneg %p312
        %p492 = pneg %p336
        %p493 = pneg %p333
        %p494 = pneg %p364
        %p495 = pneg %p361
        %s496 = sand.u32 %s351, 1
        %s497 = scalar_lea.sflag [#allocation5], %s496
        %s498 = sand.u32 %s351, 1
        %s499 = smul.addr %s498, 8
        %s500 = scalar_lea.vmem [#allocation8], %s499
        %p501 = scmp.lt.s32.totalorder %s34, 1
        %s502 = scalar_select %p501, %s34, 1
        %s503 = smul.addr %s502, 8
        %s504 = scalar_lea.vmem %s0, %s503
        %v506 = vld [vmem:[%s504] sm:$0xff]
        %v507 = vld [vmem:[%s1] sm:$0x1]
        %v508 = vld [vmem:[%s2] sm:$0x1]
        %vm509 = vcmask 261120
        %v510 = vsel %vm509, %v506, 0.0
        %511 = vadd.xlane.f32.xlu0 %v510
        %v512 = vpop.xlane.xlu0 %511
        %v513 = vrcp.pop 32.0
        %v514 = vmul.f32 %v512, %v513
        %v515 = vsub.f32 %v506, %v514
        %v516 = vmul.f32 %v515, %v515
        %v517 = vsel %vm509, %v516, 0.0
        %518 = vadd.xlane.f32.xlu0 %v517
        %v519 = vpop.xlane.xlu0 %518
        %v520 = vmul.f32 %v519, %v513
        %v521 = vadd.f32 %v520, 1e-05
        %v522 = vrsqrt.pop %v521
        %v523 = vmul.f32 %v515, %v522
        %v525 = vlaneseq
        %v526 = vshrl.u32 %v525, 7
        %v527 = vsub.s32 0, %v526
        %v528 = vrot.slane %v507, %v527
        %v530 = vmul.f32 %v523, %v528
        %v532 = vlaneseq
        %v533 = vshrl.u32 %v532, 7
        %v534 = vsub.s32 0, %v533
        %v535 = vrot.slane %v508, %v534
        %v537 = vadd.f32 %v530, %v535
        %v538 = vpack.c.bf16 %v537, %v537
        %v539 = vld [vmem:[%s3] sm:$0xf]
        %v540 = vld [vmem:[%s3 + $0x4] sm:$0xf]
        %v541 = vld [vmem:[%s3 + $0x8] sm:$0xf]
        %v542 = vld [vmem:[%s3 + $0xc] sm:$0xf]
        %v547 = vunpack.c.l.b16 %v539
        %v548 = vunpack.c.l.b16 %v540
        %v549 = vunpack.c.l.b16 %v541
        %v550 = vunpack.c.l.b16 %v542
        %v551 = vpack.c.b16 %v548, %v547
        %v552 = vpack.c.b16 %v550, %v549
        %v556 = vsel %vm509, %v538, 0
        %558 = vmatprep.subr.bf16.mxu0 0
        %559 = vmatpush1.bf16.msra.mxu0 0
        %560 = vmatprep.subr.bf16.mxu0 0
        %561 = vmatpush1.bf16.msra.mxu0 0
        %562 = vmatprep.subr.bf16.mxu0 0
        %563 = vmatpush1.bf16.msra.mxu0 0
        %564 = vmatprep.subr.bf16.mxu0 0
        %565 = vmatpush1.bf16.msra.mxu0 0
        %566 = vmatprep.subr.bf16.mxu0 0
        %567 = vmatpush1.bf16.msra.mxu0 0
        %568 = vmatprep.subr.bf16.mxu0 0
        %569 = vmatpush1.bf16.msra.mxu0 0
        %570 = vmatprep.subr.bf16.mxu0 0
        %571 = vmatpush1.bf16.msra.mxu0 %v552
        %572 = vmatprep.subr.bf16.mxu0 0
        %573 = vmatpush1.bf16.msra.mxu0 %v551
        %574 = vmatprep.subr.bf16.mxu0 0
        %575 = vmatpush2.bf16.msra.mxu0 0
        %576 = vmatprep.subr.bf16.mxu0 0
        %577 = vmatpush2.bf16.msra.mxu0 0
        %578 = vmatprep.subr.bf16.mxu0 0
        %579 = vmatpush2.bf16.msra.mxu0 0
        %580 = vmatprep.subr.bf16.mxu0 0
        %581 = vmatpush2.bf16.msra.mxu0 0
        %582 = vmatprep.subr.bf16.mxu0 0
        %583 = vmatpush2.bf16.msra.mxu0 0
        %584 = vmatprep.subr.bf16.mxu0 0
        %585 = vmatpush2.bf16.msra.mxu0 0
        %586 = vmatprep.subr.bf16.mxu0 0
        %587 = vmatpush2.bf16.msra.mxu0 0
        %588 = vmatprep.subr.bf16.mxu0 0
        %589 = vmatpush2.bf16.msra.mxu0 0
        %590 = vmatprep.mubr.bf16.mxu0 0
        %591 = vmatmul.mubr.bf16.gmra.mxu0 %v556
        %v592 = vpop.f32.mrf.mxu0
        %v593 = vadd.f32 0.0, %v592
        %v594 = vpop.f32.mrf.mxu0
        %v595 = vpop.f32.mrf.mxu0
        %v596 = vpop.f32.mrf.mxu0
        %597 = vdwg.mxu0
        %v598 = vmul.f32 %v593, 0.17677669
        %v599 = vld [vmem:[%s4] sm:$0xf]
        %v600 = vld [vmem:[%s4 + $0x4] sm:$0xf]
        %v601 = vld [vmem:[%s4 + $0x8] sm:$0xf]
        %v602 = vld [vmem:[%s4 + $0xc] sm:$0xf]
        %v607 = vunpack.c.l.b16 %v599
        %v608 = vunpack.c.l.b16 %v600
        %v609 = vunpack.c.l.b16 %v601
        %v610 = vunpack.c.l.b16 %v602
        %v611 = vpack.c.b16 %v608, %v607
        %v612 = vpack.c.b16 %v610, %v609
        %615 = vmatprep.subr.bf16.mxu0 0
        %616 = vmatpush1.bf16.msra.mxu0 0
        %617 = vmatprep.subr.bf16.mxu0 0
        %618 = vmatpush1.bf16.msra.mxu0 0
        %619 = vmatprep.subr.bf16.mxu0 0
        %620 = vmatpush1.bf16.msra.mxu0 0
        %621 = vmatprep.subr.bf16.mxu0 0
        %622 = vmatpush1.bf16.msra.mxu0 0
        %623 = vmatprep.subr.bf16.mxu0 0
        %624 = vmatpush1.bf16.msra.mxu0 0
        %625 = vmatprep.subr.bf16.mxu0 0
        %626 = vmatpush1.bf16.msra.mxu0 0
        %627 = vmatprep.subr.bf16.mxu0 0
        %628 = vmatpush1.bf16.msra.mxu0 %v612
        %629 = vmatprep.subr.bf16.mxu0 0
        %630 = vmatpush1.bf16.msra.mxu0 %v611
        %631 = vmatprep.subr.bf16.mxu0 0
        %632 = vmatpush2.bf16.msra.mxu0 0
        %633 = vmatprep.subr.bf16.mxu0 0
        %634 = vmatpush2.bf16.msra.mxu0 0
        %635 = vmatprep.subr.bf16.mxu0 0
        %636 = vmatpush2.bf16.msra.mxu0 0
        %637 = vmatprep.subr.bf16.mxu0 0
        %638 = vmatpush2.bf16.msra.mxu0 0
        %639 = vmatprep.subr.bf16.mxu0 0
        %640 = vmatpush2.bf16.msra.mxu0 0
        %641 = vmatprep.subr.bf16.mxu0 0
        %642 = vmatpush2.bf16.msra.mxu0 0
        %643 = vmatprep.subr.bf16.mxu0 0
        %644 = vmatpush2.bf16.msra.mxu0 0
        %645 = vmatprep.subr.bf16.mxu0 0
        %646 = vmatpush2.bf16.msra.mxu0 0
        %647 = vmatprep.mubr.bf16.mxu0 0
        %648 = vmatmul.mubr.bf16.gmra.mxu0 %v556
        %v649 = vpop.f32.mrf.mxu0
        %v650 = vadd.f32 0.0, %v649
        %v651 = vpop.f32.mrf.mxu0
        %v652 = vpop.f32.mrf.mxu0
        %v653 = vpop.f32.mrf.mxu0
        %654 = vdwg.mxu0
        %v655 = vld [vmem:[%s5] sm:$0xf]
        %v656 = vld [vmem:[%s5 + $0x4] sm:$0xf]
        %v657 = vld [vmem:[%s5 + $0x8] sm:$0xf]
        %v658 = vld [vmem:[%s5 + $0xc] sm:$0xf]
        %v663 = vunpack.c.l.b16 %v655
        %v664 = vunpack.c.l.b16 %v656
        %v665 = vunpack.c.l.b16 %v657
        %v666 = vunpack.c.l.b16 %v658
        %v667 = vpack.c.b16 %v664, %v663
        %v668 = vpack.c.b16 %v666, %v665
        %671 = vmatprep.subr.bf16.mxu0 0
        %672 = vmatpush1.bf16.msra.mxu0 0
        %673 = vmatprep.subr.bf16.mxu0 0
        %674 = vmatpush1.bf16.msra.mxu0 0
        %675 = vmatprep.subr.bf16.mxu0 0
        %676 = vmatpush1.bf16.msra.mxu0 0
        %677 = vmatprep.subr.bf16.mxu0 0
        %678 = vmatpush1.bf16.msra.mxu0 0
        %679 = vmatprep.subr.bf16.mxu0 0
        %680 = vmatpush1.bf16.msra.mxu0 0
        %681 = vmatprep.subr.bf16.mxu0 0
        %682 = vmatpush1.bf16.msra.mxu0 0
        %683 = vmatprep.subr.bf16.mxu0 0
        %684 = vmatpush1.bf16.msra.mxu0 %v668
        %685 = vmatprep.subr.bf16.mxu0 0
        %686 = vmatpush1.bf16.msra.mxu0 %v667
        %687 = vmatprep.subr.bf16.mxu0 0
        %688 = vmatpush2.bf16.msra.mxu0 0
        %689 = vmatprep.subr.bf16.mxu0 0
        %690 = vmatpush2.bf16.msra.mxu0 0
        %691 = vmatprep.subr.bf16.mxu0 0
        %692 = vmatpush2.bf16.msra.mxu0 0
        %693 = vmatprep.subr.bf16.mxu0 0
        %694 = vmatpush2.bf16.msra.mxu0 0
        %695 = vmatprep.subr.bf16.mxu0 0
        %696 = vmatpush2.bf16.msra.mxu0 0
        %697 = vmatprep.subr.bf16.mxu0 0
        %698 = vmatpush2.bf16.msra.mxu0 0
        %699 = vmatprep.subr.bf16.mxu0 0
        %700 = vmatpush2.bf16.msra.mxu0 0
        %701 = vmatprep.subr.bf16.mxu0 0
        %702 = vmatpush2.bf16.msra.mxu0 0
        %703 = vmatprep.mubr.bf16.mxu0 0
        %704 = vmatmul.mubr.bf16.gmra.mxu0 %v556
        %v705 = vpop.f32.mrf.mxu0
        %v706 = vadd.f32 0.0, %v705
        %v707 = vpop.f32.mrf.mxu0
        %v708 = vpop.f32.mrf.mxu0
        %v709 = vpop.f32.mrf.mxu0
        %710 = vdwg.mxu0
        %v711 = vlaneseq
        %v712 = vshrl.u32 %v711, 7
        %v713 = vlaneseq
        %v714 = vand.u32 %v713, 127
        %vm715 = vcmp.ge.s32.totalorder %v712, %v714
        %v716 = vpack.c.bf16 %v598, %v598
        %v717 = vpack.c.bf16 %v650, %v650
        %v718 = vpack.c.bf16 %v706, %v706
        %vm719 = vcmask 64512
        %v721 = vsel %vm719, %v716, 0
        %v724 = vsel %vm719, %v717, 0
        %726 = vmatprep.subr.bf16.mxu0 0
        %727 = vmatpush1.bf16.xpose.msra.mxu0 0
        %728 = vmatprep.subr.bf16.mxu0 0
        %729 = vmatpush1.bf16.xpose.msra.mxu0 0
        %730 = vmatprep.subr.bf16.mxu0 0
        %731 = vmatpush1.bf16.xpose.msra.mxu0 0
        %732 = vmatprep.subr.bf16.mxu0 0
        %733 = vmatpush1.bf16.xpose.msra.mxu0 0
        %734 = vmatprep.subr.bf16.mxu0 0
        %735 = vmatpush1.bf16.xpose.msra.mxu0 0
        %736 = vmatprep.subr.bf16.mxu0 0
        %737 = vmatpush1.bf16.xpose.msra.mxu0 0
        %738 = vmatprep.subr.bf16.mxu0 0
        %739 = vmatpush1.bf16.xpose.msra.mxu0 0
        %740 = vmatprep.subr.bf16.mxu0 0
        %741 = vmatpush1.bf16.xpose.msra.mxu0 %v724
        %742 = vmatprep.subr.bf16.mxu0 0
        %743 = vmatpush2.bf16.xpose.msra.mxu0 0
        %744 = vmatprep.subr.bf16.mxu0 0
        %745 = vmatpush2.bf16.xpose.msra.mxu0 0
        %746 = vmatprep.subr.bf16.mxu0 0
        %747 = vmatpush2.bf16.xpose.msra.mxu0 0
        %748 = vmatprep.subr.bf16.mxu0 0
        %749 = vmatpush2.bf16.xpose.msra.mxu0 0
        %750 = vmatprep.subr.bf16.mxu0 0
        %751 = vmatpush2.bf16.xpose.msra.mxu0 0
        %752 = vmatprep.subr.bf16.mxu0 0
        %753 = vmatpush2.bf16.xpose.msra.mxu0 0
        %754 = vmatprep.subr.bf16.mxu0 0
        %755 = vmatpush2.bf16.xpose.msra.mxu0 0
        %756 = vmatprep.subr.bf16.mxu0 0
        %757 = vmatpush2.bf16.xpose.msra.mxu0 0
        %758 = vmatprep.mubr.bf16.mxu0 0
        %759 = vmatmul.mubr.bf16.gmra.mxu0 %v721
        %v760 = vpop.f32.mrf.mxu0
        %v761 = vadd.f32 0.0, %v760
        %v762 = vpop.f32.mrf.mxu0
        %v763 = vpop.f32.mrf.mxu0
        %v764 = vpop.f32.mrf.mxu0
        %765 = vdwg.mxu0
        %v766 = vsel %vm715, %v761, -1e+30
        %v767 = vsel %vm719, %v766, -inf
        %768 = vmax.xlane.f32.xlu0 %v767
        %v769 = vpop.xlane.xlu0 %768
        %v770 = vsub.f32 %v766, %v769
        %v771 = vmul.f32 %v770, 1.442695
        %v772 = vpow.pop %v771
        %v773 = vsel %vm719, %v772, 0.0
        %774 = vadd.xlane.f32.xlu0 %v773
        %v775 = vpop.xlane.xlu0 %774
        %v776 = vrcp.pop %v775
        %v777 = vmul.f32 %v772, %v776
        %v778 = vpack.c.bf16 %v777, %v777
        %v780 = vsel %vm719, %v778, 0
        %vm782 = vcmask 1043456
        %v784 = vsel %vm782, %v718, 0
        %786 = vmatprep.subr.bf16.mxu0 0
        %787 = vmatpush1.bf16.msra.mxu0 0
        %788 = vmatprep.subr.bf16.mxu0 0
        %789 = vmatpush1.bf16.msra.mxu0 0
        %790 = vmatprep.subr.bf16.mxu0 0
        %791 = vmatpush1.bf16.msra.mxu0 0
        %792 = vmatprep.subr.bf16.mxu0 0
        %793 = vmatpush1.bf16.msra.mxu0 0
        %794 = vmatprep.subr.bf16.mxu0 0
        %795 = vmatpush1.bf16.msra.mxu0 0
        %796 = vmatprep.subr.bf16.mxu0 0
        %797 = vmatpush1.bf16.msra.mxu0 0
        %798 = vmatprep.subr.bf16.mxu0 0
        %799 = vmatpush1.bf16.msra.mxu0 0
        %800 = vmatprep.subr.bf16.mxu0 0
        %801 = vmatpush1.bf16.msra.mxu0 %v784
        %802 = vmatprep.subr.bf16.mxu0 0
        %803 = vmatpush2.bf16.msra.mxu0 0
        %804 = vmatprep.subr.bf16.mxu0 0
        %805 = vmatpush2.bf16.msra.mxu0 0
        %806 = vmatprep.subr.bf16.mxu0 0
        %807 = vmatpush2.bf16.msra.mxu0 0
        %808 = vmatprep.subr.bf16.mxu0 0
        %809 = vmatpush2.bf16.msra.mxu0 0
        %810 = vmatprep.subr.bf16.mxu0 0
        %811 = vmatpush2.bf16.msra.mxu0 0
        %812 = vmatprep.subr.bf16.mxu0 0
        %813 = vmatpush2.bf16.msra.mxu0 0
        %814 = vmatprep.subr.bf16.mxu0 0
        %815 = vmatpush2.bf16.msra.mxu0 0
        %816 = vmatprep.subr.bf16.mxu0 0
        %817 = vmatpush2.bf16.msra.mxu0 0
        %818 = vmatprep.mubr.bf16.mxu0 0
        %819 = vmatmul.mubr.bf16.gmra.mxu0 %v780
        %v820 = vpop.f32.mrf.mxu0
        %v821 = vadd.f32 0.0, %v820
        %v822 = vpop.f32.mrf.mxu0
        %v823 = vpop.f32.mrf.mxu0
        %v824 = vpop.f32.mrf.mxu0
        %825 = vdwg.mxu0
        %826 = vst.msk [vmem:[#allocation2] sm:$0xff] %vm719, %v821
        %828 = vrot.lane.b32.xlu0 %v716, 120
        %v829 = vpop.permute.xlu0 %828
        %831 = vrot.lane.b32.xlu0 %v717, 120
        %v832 = vpop.permute.xlu0 %831
        %v834 = vsel %vm719, %v829, 0
        %v837 = vsel %vm719, %v832, 0
        %839 = vmatprep.subr.bf16.mxu0 0
        %840 = vmatpush1.bf16.xpose.msra.mxu0 0
        %841 = vmatprep.subr.bf16.mxu0 0
        %842 = vmatpush1.bf16.xpose.msra.mxu0 0
        %843 = vmatprep.subr.bf16.mxu0 0
        %844 = vmatpush1.bf16.xpose.msra.mxu0 0
        %845 = vmatprep.subr.bf16.mxu0 0
        %846 = vmatpush1.bf16.xpose.msra.mxu0 0
        %847 = vmatprep.subr.bf16.mxu0 0
        %848 = vmatpush1.bf16.xpose.msra.mxu0 0
        %849 = vmatprep.subr.bf16.mxu0 0
        %850 = vmatpush1.bf16.xpose.msra.mxu0 0
        %851 = vmatprep.subr.bf16.mxu0 0
        %852 = vmatpush1.bf16.xpose.msra.mxu0 0
        %853 = vmatprep.subr.bf16.mxu0 0
        %854 = vmatpush1.bf16.xpose.msra.mxu0 %v837
        %855 = vmatprep.subr.bf16.mxu0 0
        %856 = vmatpush2.bf16.xpose.msra.mxu0 0
        %857 = vmatprep.subr.bf16.mxu0 0
        %858 = vmatpush2.bf16.xpose.msra.mxu0 0
        %859 = vmatprep.subr.bf16.mxu0 0
        %860 = vmatpush2.bf16.xpose.msra.mxu0 0
        %861 = vmatprep.subr.bf16.mxu0 0
        %862 = vmatpush2.bf16.xpose.msra.mxu0 0
        %863 = vmatprep.subr.bf16.mxu0 0
        %864 = vmatpush2.bf16.xpose.msra.mxu0 0
        %865 = vmatprep.subr.bf16.mxu0 0
        %866 = vmatpush2.bf16.xpose.msra.mxu0 0
        %867 = vmatprep.subr.bf16.mxu0 0
        %868 = vmatpush2.bf16.xpose.msra.mxu0 0
        %869 = vmatprep.subr.bf16.mxu0 0
        %870 = vmatpush2.bf16.xpose.msra.mxu0 0
        %871 = vmatprep.mubr.bf16.mxu0 0
        %872 = vmatmul.mubr.bf16.gmra.mxu0 %v834
        %v873 = vpop.f32.mrf.mxu0
        %v874 = vadd.f32 0.0, %v873
        %v875 = vpop.f32.mrf.mxu0
        %v876 = vpop.f32.mrf.mxu0
        %v877 = vpop.f32.mrf.mxu0
        %878 = vdwg.mxu0
        %v879 = vsel %vm715, %v874, -1e+30
        %v880 = vsel %vm719, %v879, -inf
        %881 = vmax.xlane.f32.xlu0 %v880
        %v882 = vpop.xlane.xlu0 %881
        %v883 = vsub.f32 %v879, %v882
        %v884 = vmul.f32 %v883, 1.442695
        %v885 = vpow.pop %v884
        %v886 = vsel %vm719, %v885, 0.0
        %887 = vadd.xlane.f32.xlu0 %v886
        %v888 = vpop.xlane.xlu0 %887
        %v889 = vrcp.pop %v888
        %v890 = vmul.f32 %v885, %v889
        %v891 = vpack.c.bf16 %v890, %v890
        %893 = vrot.lane.b32.xlu0 %v718, 120
        %v894 = vpop.permute.xlu0 %893
        %v896 = vsel %vm719, %v891, 0
        %v899 = vsel %vm782, %v894, 0
        %901 = vmatprep.subr.bf16.mxu0 0
        %902 = vmatpush1.bf16.msra.mxu0 0
        %903 = vmatprep.subr.bf16.mxu0 0
        %904 = vmatpush1.bf16.msra.mxu0 0
        %905 = vmatprep.subr.bf16.mxu0 0
        %906 = vmatpush1.bf16.msra.mxu0 0
        %907 = vmatprep.subr.bf16.mxu0 0
        %908 = vmatpush1.bf16.msra.mxu0 0
        %909 = vmatprep.subr.bf16.mxu0 0
        %910 = vmatpush1.bf16.msra.mxu0 0
        %911 = vmatprep.subr.bf16.mxu0 0
        %912 = vmatpush1.bf16.msra.mxu0 0
        %913 = vmatprep.subr.bf16.mxu0 0
        %914 = vmatpush1.bf16.msra.mxu0 0
        %915 = vmatprep.subr.bf16.mxu0 0
        %916 = vmatpush1.bf16.msra.mxu0 %v899
        %917 = vmatprep.subr.bf16.mxu0 0
        %918 = vmatpush2.bf16.msra.mxu0 0
        %919 = vmatprep.subr.bf16.mxu0 0
        %920 = vmatpush2.bf16.msra.mxu0 0
        %921 = vmatprep.subr.bf16.mxu0 0
        %922 = vmatpush2.bf16.msra.mxu0 0
        %923 = vmatprep.subr.bf16.mxu0 0
        %924 = vmatpush2.bf16.msra.mxu0 0
        %925 = vmatprep.subr.bf16.mxu0 0
        %926 = vmatpush2.bf16.msra.mxu0 0
        %927 = vmatprep.subr.bf16.mxu0 0
        %928 = vmatpush2.bf16.msra.mxu0 0
        %929 = vmatprep.subr.bf16.mxu0 0
        %930 = vmatpush2.bf16.msra.mxu0 0
        %931 = vmatprep.subr.bf16.mxu0 0
        %932 = vmatpush2.bf16.msra.mxu0 0
        %933 = vmatprep.mubr.bf16.mxu0 0
        %934 = vmatmul.mubr.bf16.gmra.mxu0 %v896
        %v935 = vpop.f32.mrf.mxu0
        %v936 = vadd.f32 0.0, %v935
        %v937 = vpop.f32.mrf.mxu0
        %v938 = vpop.f32.mrf.mxu0
        %v939 = vpop.f32.mrf.mxu0
        %940 = vdwg.mxu0
        %942 = vrot.lane.b32.xlu0 %v936, 8
        %v943 = vpop.permute.xlu0 %942
        %vm945 = vcmask 130112
        %946 = vst.msk [vmem:[#allocation2] sm:$0xff] %vm945, %v943
        %947 = vrot.lane.b32.xlu0 %v716, 112
        %v948 = vpop.permute.xlu0 %947
        %949 = vrot.lane.b32.xlu0 %v717, 112
        %v950 = vpop.permute.xlu0 %949
        %v952 = vsel %vm719, %v948, 0
        %v955 = vsel %vm719, %v950, 0
        %957 = vmatprep.subr.bf16.mxu0 0
        %958 = vmatpush1.bf16.xpose.msra.mxu0 0
        %959 = vmatprep.subr.bf16.mxu0 0
        %960 = vmatpush1.bf16.xpose.msra.mxu0 0
        %961 = vmatprep.subr.bf16.mxu0 0
        %962 = vmatpush1.bf16.xpose.msra.mxu0 0
        %963 = vmatprep.subr.bf16.mxu0 0
        %964 = vmatpush1.bf16.xpose.msra.mxu0 0
        %965 = vmatprep.subr.bf16.mxu0 0
        %966 = vmatpush1.bf16.xpose.msra.mxu0 0
        %967 = vmatprep.subr.bf16.mxu0 0
        %968 = vmatpush1.bf16.xpose.msra.mxu0 0
        %969 = vmatprep.subr.bf16.mxu0 0
        %970 = vmatpush1.bf16.xpose.msra.mxu0 0
        %971 = vmatprep.subr.bf16.mxu0 0
        %972 = vmatpush1.bf16.xpose.msra.mxu0 %v955
        %973 = vmatprep.subr.bf16.mxu0 0
        %974 = vmatpush2.bf16.xpose.msra.mxu0 0
        %975 = vmatprep.subr.bf16.mxu0 0
        %976 = vmatpush2.bf16.xpose.msra.mxu0 0
        %977 = vmatprep.subr.bf16.mxu0 0
        %978 = vmatpush2.bf16.xpose.msra.mxu0 0
        %979 = vmatprep.subr.bf16.mxu0 0
        %980 = vmatpush2.bf16.xpose.msra.mxu0 0
        %981 = vmatprep.subr.bf16.mxu0 0
        %982 = vmatpush2.bf16.xpose.msra.mxu0 0
        %983 = vmatprep.subr.bf16.mxu0 0
        %984 = vmatpush2.bf16.xpose.msra.mxu0 0
        %985 = vmatprep.subr.bf16.mxu0 0
        %986 = vmatpush2.bf16.xpose.msra.mxu0 0
        %987 = vmatprep.subr.bf16.mxu0 0
        %988 = vmatpush2.bf16.xpose.msra.mxu0 0
        %989 = vmatprep.mubr.bf16.mxu0 0
        %990 = vmatmul.mubr.bf16.gmra.mxu0 %v952
        %v991 = vpop.f32.mrf.mxu0
        %v992 = vadd.f32 0.0, %v991
        %v993 = vpop.f32.mrf.mxu0
        %v994 = vpop.f32.mrf.mxu0
        %v995 = vpop.f32.mrf.mxu0
        %996 = vdwg.mxu0
        %v997 = vsel %vm715, %v992, -1e+30
        %v998 = vsel %vm719, %v997, -inf
        %999 = vmax.xlane.f32.xlu0 %v998
        %v1000 = vpop.xlane.xlu0 %999
        %v1001 = vsub.f32 %v997, %v1000
        %v1002 = vmul.f32 %v1001, 1.442695
        %v1003 = vpow.pop %v1002
        %v1004 = vsel %vm719, %v1003, 0.0
        %1005 = vadd.xlane.f32.xlu0 %v1004
        %v1006 = vpop.xlane.xlu0 %1005
        %v1007 = vrcp.pop %v1006
        %v1008 = vmul.f32 %v1003, %v1007
        %v1009 = vpack.c.bf16 %v1008, %v1008
        %1010 = vrot.lane.b32.xlu0 %v718, 112
        %v1011 = vpop.permute.xlu0 %1010
        %v1013 = vsel %vm719, %v1009, 0
        %v1016 = vsel %vm782, %v1011, 0
        %1018 = vmatprep.subr.bf16.mxu0 0
        %1019 = vmatpush1.bf16.msra.mxu0 0
        %1020 = vmatprep.subr.bf16.mxu0 0
        %1021 = vmatpush1.bf16.msra.mxu0 0
        %1022 = vmatprep.subr.bf16.mxu0 0
        %1023 = vmatpush1.bf16.msra.mxu0 0
        %1024 = vmatprep.subr.bf16.mxu0 0
        %1025 = vmatpush1.bf16.msra.mxu0 0
        %1026 = vmatprep.subr.bf16.mxu0 0
        %1027 = vmatpush1.bf16.msra.mxu0 0
        %1028 = vmatprep.subr.bf16.mxu0 0
        %1029 = vmatpush1.bf16.msra.mxu0 0
        %1030 = vmatprep.subr.bf16.mxu0 0
        %1031 = vmatpush1.bf16.msra.mxu0 0
        %1032 = vmatprep.subr.bf16.mxu0 0
        %1033 = vmatpush1.bf16.msra.mxu0 %v1016
        %1034 = vmatprep.subr.bf16.mxu0 0
        %1035 = vmatpush2.bf16.msra.mxu0 0
        %1036 = vmatprep.subr.bf16.mxu0 0
        %1037 = vmatpush2.bf16.msra.mxu0 0
        %1038 = vmatprep.subr.bf16.mxu0 0
        %1039 = vmatpush2.bf16.msra.mxu0 0
        %1040 = vmatprep.subr.bf16.mxu0 0
        %1041 = vmatpush2.bf16.msra.mxu0 0
        %1042 = vmatprep.subr.bf16.mxu0 0
        %1043 = vmatpush2.bf16.msra.mxu0 0
        %1044 = vmatprep.subr.bf16.mxu0 0
        %1045 = vmatpush2.bf16.msra.mxu0 0
        %1046 = vmatprep.subr.bf16.mxu0 0
        %1047 = vmatpush2.bf16.msra.mxu0 0
        %1048 = vmatprep.subr.bf16.mxu0 0
        %1049 = vmatpush2.bf16.msra.mxu0 0
        %1050 = vmatprep.mubr.bf16.mxu0 0
        %1051 = vmatmul.mubr.bf16.gmra.mxu0 %v1013
        %v1052 = vpop.f32.mrf.mxu0
        %v1053 = vadd.f32 0.0, %v1052
        %v1054 = vpop.f32.mrf.mxu0
        %v1055 = vpop.f32.mrf.mxu0
        %v1056 = vpop.f32.mrf.mxu0
        %1057 = vdwg.mxu0
        %1059 = vrot.lane.b32.xlu0 %v1053, 16
        %v1060 = vpop.permute.xlu0 %1059
        %vm1062 = vcmask 195712
        %1063 = vst.msk [vmem:[#allocation2] sm:$0xff] %vm1062, %v1060
        %1064 = vrot.lane.b32.xlu0 %v716, 104
        %v1065 = vpop.permute.xlu0 %1064
        %1066 = vrot.lane.b32.xlu0 %v717, 104
        %v1067 = vpop.permute.xlu0 %1066
        %v1069 = vsel %vm719, %v1065, 0
        %v1072 = vsel %vm719, %v1067, 0
        %1074 = vmatprep.subr.bf16.mxu0 0
        %1075 = vmatpush1.bf16.xpose.msra.mxu0 0
        %1076 = vmatprep.subr.bf16.mxu0 0
        %1077 = vmatpush1.bf16.xpose.msra.mxu0 0
        %1078 = vmatprep.subr.bf16.mxu0 0
        %1079 = vmatpush1.bf16.xpose.msra.mxu0 0
        %1080 = vmatprep.subr.bf16.mxu0 0
        %1081 = vmatpush1.bf16.xpose.msra.mxu0 0
        %1082 = vmatprep.subr.bf16.mxu0 0
        %1083 = vmatpush1.bf16.xpose.msra.mxu0 0
        %1084 = vmatprep.subr.bf16.mxu0 0
        %1085 = vmatpush1.bf16.xpose.msra.mxu0 0
        %1086 = vmatprep.subr.bf16.mxu0 0
        %1087 = vmatpush1.bf16.xpose.msra.mxu0 0
        %1088 = vmatprep.subr.bf16.mxu0 0
        %1089 = vmatpush1.bf16.xpose.msra.mxu0 %v1072
        %1090 = vmatprep.subr.bf16.mxu0 0
        %1091 = vmatpush2.bf16.xpose.msra.mxu0 0
        %1092 = vmatprep.subr.bf16.mxu0 0
        %1093 = vmatpush2.bf16.xpose.msra.mxu0 0
        %1094 = vmatprep.subr.bf16.mxu0 0
        %1095 = vmatpush2.bf16.xpose.msra.mxu0 0
        %1096 = vmatprep.subr.bf16.mxu0 0
        %1097 = vmatpush2.bf16.xpose.msra.mxu0 0
        %1098 = vmatprep.subr.bf16.mxu0 0
        %1099 = vmatpush2.bf16.xpose.msra.mxu0 0
        %1100 = vmatprep.subr.bf16.mxu0 0
        %1101 = vmatpush2.bf16.xpose.msra.mxu0 0
        %1102 = vmatprep.subr.bf16.mxu0 0
        %1103 = vmatpush2.bf16.xpose.msra.mxu0 0
        %1104 = vmatprep.subr.bf16.mxu0 0
        %1105 = vmatpush2.bf16.xpose.msra.mxu0 0
        %1106 = vmatprep.mubr.bf16.mxu0 0
        %1107 = vmatmul.mubr.bf16.gmra.mxu0 %v1069
        %v1108 = vpop.f32.mrf.mxu0
        %v1109 = vadd.f32 0.0, %v1108
        %v1110 = vpop.f32.mrf.mxu0
        %v1111 = vpop.f32.mrf.mxu0
        %v1112 = vpop.f32.mrf.mxu0
        %1113 = vdwg.mxu0
        %v1114 = vsel %vm715, %v1109, -1e+30
        %v1115 = vsel %vm719, %v1114, -inf
        %1116 = vmax.xlane.f32.xlu0 %v1115
        %v1117 = vpop.xlane.xlu0 %1116
        %v1118 = vsub.f32 %v1114, %v1117
        %v1119 = vmul.f32 %v1118, 1.442695
        %v1120 = vpow.pop %v1119
        %v1121 = vsel %vm719, %v1120, 0.0
        %1122 = vadd.xlane.f32.xlu0 %v1121
        %v1123 = vpop.xlane.xlu0 %1122
        %v1124 = vrcp.pop %v1123
        %v1125 = vmul.f32 %v1120, %v1124
        %v1126 = vpack.c.bf16 %v1125, %v1125
        %1127 = vrot.lane.b32.xlu0 %v718, 104
        %v1128 = vpop.permute.xlu0 %1127
        %v1130 = vsel %vm719, %v1126, 0
        %v1133 = vsel %vm782, %v1128, 0
        %1135 = vmatprep.subr.bf16.mxu0 0
        %1136 = vmatpush1.bf16.msra.mxu0 0
        %1137 = vmatprep.subr.bf16.mxu0 0
        %1138 = vmatpush1.bf16.msra.mxu0 0
        %1139 = vmatprep.subr.bf16.mxu0 0
        %1140 = vmatpush1.bf16.msra.mxu0 0
        %1141 = vmatprep.subr.bf16.mxu0 0
        %1142 = vmatpush1.bf16.msra.mxu0 0
        %1143 = vmatprep.subr.bf16.mxu0 0
        %1144 = vmatpush1.bf16.msra.mxu0 0
        %1145 = vmatprep.subr.bf16.mxu0 0
        %1146 = vmatpush1.bf16.msra.mxu0 0
        %1147 = vmatprep.subr.bf16.mxu0 0
        %1148 = vmatpush1.bf16.msra.mxu0 0
        %1149 = vmatprep.subr.bf16.mxu0 0
        %1150 = vmatpush1.bf16.msra.mxu0 %v1133
        %1151 = vmatprep.subr.bf16.mxu0 0
        %1152 = vmatpush2.bf16.msra.mxu0 0
        %1153 = vmatprep.subr.bf16.mxu0 0
        %1154 = vmatpush2.bf16.msra.mxu0 0
        %1155 = vmatprep.subr.bf16.mxu0 0
        %1156 = vmatpush2.bf16.msra.mxu0 0
        %1157 = vmatprep.subr.bf16.mxu0 0
        %1158 = vmatpush2.bf16.msra.mxu0 0
        %1159 = vmatprep.subr.bf16.mxu0 0
        %1160 = vmatpush2.bf16.msra.mxu0 0
        %1161 = vmatprep.subr.bf16.mxu0 0
        %1162 = vmatpush2.bf16.msra.mxu0 0
        %1163 = vmatprep.subr.bf16.mxu0 0
        %1164 = vmatpush2.bf16.msra.mxu0 0
        %1165 = vmatprep.subr.bf16.mxu0 0
        %1166 = vmatpush2.bf16.msra.mxu0 0
        %1167 = vmatprep.mubr.bf16.mxu0 0
        %1168 = vmatmul.mubr.bf16.gmra.mxu0 %v1130
        %v1169 = vpop.f32.mrf.mxu0
        %v1170 = vadd.f32 0.0, %v1169
        %v1171 = vpop.f32.mrf.mxu0
        %v1172 = vpop.f32.mrf.mxu0
        %v1173 = vpop.f32.mrf.mxu0
        %1174 = vdwg.mxu0
        %1176 = vrot.lane.b32.xlu0 %v1170, 24
        %v1177 = vpop.permute.xlu0 %1176
        %vm1179 = vcmask 261312
        %1180 = vst.msk [vmem:[#allocation2] sm:$0xff] %vm1179, %v1177
        %v1181 = vld [vmem:[#allocation2] sm:$0xff]
        %v1182 = vpack.c.bf16 %v1181, %v1181
        %v1183 = vld [vmem:[%s6] sm:$0xf]
        %v1184 = vld [vmem:[%s6 + $0x4] sm:$0xf]
        %v1185 = vld [vmem:[%s6 + $0x8] sm:$0xf]
        %v1186 = vld [vmem:[%s6 + $0xc] sm:$0xf]
        %v1187 = vld [vmem:[%s7] sm:$0x1]
        %v1189 = vlaneseq
        %v1190 = vshrl.u32 %v1189, 7
        %v1191 = vsub.s32 0, %v1190
        %v1192 = vrot.slane %v1187, %v1191
        %v1198 = vunpack.c.l.b16 %v1183
        %v1199 = vunpack.c.l.b16 %v1184
        %v1200 = vunpack.c.l.b16 %v1185
        %v1201 = vunpack.c.l.b16 %v1186
        %v1202 = vpack.c.b16 %v1199, %v1198
        %v1203 = vpack.c.b16 %v1201, %v1200
        %v1207 = vsel %vm509, %v1182, 0
        %1209 = vmatprep.subr.bf16.mxu0 0
        %1210 = vmatpush1.bf16.msra.mxu0 0
        %1211 = vmatprep.subr.bf16.mxu0 0
        %1212 = vmatpush1.bf16.msra.mxu0 0
        %1213 = vmatprep.subr.bf16.mxu0 0
        %1214 = vmatpush1.bf16.msra.mxu0 0
        %1215 = vmatprep.subr.bf16.mxu0 0
        %1216 = vmatpush1.bf16.msra.mxu0 0
        %1217 = vmatprep.subr.bf16.mxu0 0
        %1218 = vmatpush1.bf16.msra.mxu0 0
        %1219 = vmatprep.subr.bf16.mxu0 0
        %1220 = vmatpush1.bf16.msra.mxu0 0
        %1221 = vmatprep.subr.bf16.mxu0 0
        %1222 = vmatpush1.bf16.msra.mxu0 %v1203
        %1223 = vmatprep.subr.bf16.mxu0 0
        %1224 = vmatpush1.bf16.msra.mxu0 %v1202
        %1225 = vmatprep.subr.bf16.mxu0 0
        %1226 = vmatpush2.bf16.msra.mxu0 0
        %1227 = vmatprep.subr.bf16.mxu0 0
        %1228 = vmatpush2.bf16.msra.mxu0 0
        %1229 = vmatprep.subr.bf16.mxu0 0
        %1230 = vmatpush2.bf16.msra.mxu0 0
        %1231 = vmatprep.subr.bf16.mxu0 0
        %1232 = vmatpush2.bf16.msra.mxu0 0
        %1233 = vmatprep.subr.bf16.mxu0 0
        %1234 = vmatpush2.bf16.msra.mxu0 0
        %1235 = vmatprep.subr.bf16.mxu0 0
        %1236 = vmatpush2.bf16.msra.mxu0 0
        %1237 = vmatprep.subr.bf16.mxu0 0
        %1238 = vmatpush2.bf16.msra.mxu0 0
        %1239 = vmatprep.subr.bf16.mxu0 0
        %1240 = vmatpush2.bf16.msra.mxu0 0
        %1241 = vmatprep.mubr.bf16.mxu0 0
        %1242 = vmatmul.mubr.bf16.gmra.mxu0 %v1207
        %v1243 = vpop.f32.mrf.mxu0
        %v1244 = vadd.f32 %v1192, %v1243
        %v1245 = vpop.f32.mrf.mxu0
        %v1246 = vpop.f32.mrf.mxu0
        %v1247 = vpop.f32.mrf.mxu0
        %1248 = vdwg.mxu0
        %v1249 = vadd.f32 %v506, %v1244
        %v1250 = vld [vmem:[%s8] sm:$0x1]
        %v1251 = vld [vmem:[%s9] sm:$0x1]
        %v1252 = vsel %vm509, %v1249, 0.0
        %1253 = vadd.xlane.f32.xlu0 %v1252
        %v1254 = vpop.xlane.xlu0 %1253
        %v1255 = vmul.f32 %v1254, %v513
        %v1256 = vsub.f32 %v1249, %v1255
        %v1257 = vmul.f32 %v1256, %v1256
        %v1258 = vsel %vm509, %v1257, 0.0
        %1259 = vadd.xlane.f32.xlu0 %v1258
        %v1260 = vpop.xlane.xlu0 %1259
        %v1261 = vmul.f32 %v1260, %v513
        %v1262 = vadd.f32 %v1261, 1e-05
        %v1263 = vrsqrt.pop %v1262
        %v1264 = vmul.f32 %v1256, %v1263
        %v1266 = vlaneseq
        %v1267 = vshrl.u32 %v1266, 7
        %v1268 = vsub.s32 0, %v1267
        %v1269 = vrot.slane %v1250, %v1268
        %v1271 = vmul.f32 %v1264, %v1269
        %v1273 = vlaneseq
        %v1274 = vshrl.u32 %v1273, 7
        %v1275 = vsub.s32 0, %v1274
        %v1276 = vrot.slane %v1251, %v1275
        %v1278 = vadd.f32 %v1271, %v1276
        %v1279 = vpack.c.bf16 %v1278, %v1278
        %v1280 = vld [vmem:[#allocation3] sm:$0xf]
        %v1281 = vld [vmem:[#allocation3 + $0x4] sm:$0xf]
        %v1282 = vld [vmem:[#allocation3 + $0x8] sm:$0xf]
        %v1283 = vld [vmem:[#allocation3 + $0xc] sm:$0xf]
        %v1284 = vld [vmem:[#allocation6] sm:$0x1]
        %v1286 = vlaneseq
        %v1287 = vshrl.u32 %v1286, 7
        %v1288 = vsub.s32 0, %v1287
        %v1289 = vrot.slane %v1284, %v1288
        %v1295 = vunpack.c.l.b16 %v1280
        %v1296 = vunpack.c.l.b16 %v1281
        %v1297 = vunpack.c.l.b16 %v1282
        %v1298 = vunpack.c.l.b16 %v1283
        %v1299 = vpack.c.b16 %v1296, %v1295
        %v1300 = vpack.c.b16 %v1298, %v1297
        %v1304 = vsel %vm509, %v1279, 0
        %1306 = vmatprep.subr.bf16.mxu0 0
        %1307 = vmatpush1.bf16.msra.mxu0 0
        %1308 = vmatprep.subr.bf16.mxu0 0
        %1309 = vmatpush1.bf16.msra.mxu0 0
        %1310 = vmatprep.subr.bf16.mxu0 0
        %1311 = vmatpush1.bf16.msra.mxu0 0
        %1312 = vmatprep.subr.bf16.mxu0 0
        %1313 = vmatpush1.bf16.msra.mxu0 0
        %1314 = vmatprep.subr.bf16.mxu0 0
        %1315 = vmatpush1.bf16.msra.mxu0 0
        %1316 = vmatprep.subr.bf16.mxu0 0
        %1317 = vmatpush1.bf16.msra.mxu0 0
        %1318 = vmatprep.subr.bf16.mxu0 0
        %1319 = vmatpush1.bf16.msra.mxu0 %v1300
        %1320 = vmatprep.subr.bf16.mxu0 0
        %1321 = vmatpush1.bf16.msra.mxu0 %v1299
        %1322 = vmatprep.subr.bf16.mxu0 0
        %1323 = vmatpush2.bf16.msra.mxu0 0
        %1324 = vmatprep.subr.bf16.mxu0 0
        %1325 = vmatpush2.bf16.msra.mxu0 0
        %1326 = vmatprep.subr.bf16.mxu0 0
        %1327 = vmatpush2.bf16.msra.mxu0 0
        %1328 = vmatprep.subr.bf16.mxu0 0
        %1329 = vmatpush2.bf16.msra.mxu0 0
        %1330 = vmatprep.subr.bf16.mxu0 0
        %1331 = vmatpush2.bf16.msra.mxu0 0
        %1332 = vmatprep.subr.bf16.mxu0 0
        %1333 = vmatpush2.bf16.msra.mxu0 0
        %1334 = vmatprep.subr.bf16.mxu0 0
        %1335 = vmatpush2.bf16.msra.mxu0 0
        %1336 = vmatprep.subr.bf16.mxu0 0
        %1337 = vmatpush2.bf16.msra.mxu0 0
        %1338 = vmatprep.mubr.bf16.mxu0 0
        %1339 = vmatmul.mubr.bf16.gmra.mxu0 %v1304
        %v1340 = vpop.f32.mrf.mxu0
        %v1341 = vadd.f32 %v1289, %v1340
        %v1342 = vpop.f32.mrf.mxu0
        %v1343 = vpop.f32.mrf.mxu0
        %v1344 = vpop.f32.mrf.mxu0
        %1345 = vdwg.mxu0
        %v1346 = vmax.f32 %v1341, 0.0
        %v1347 = vpack.c.bf16 %v1346, %v1346
        %v1348 = vld [vmem:[%s12] sm:$0xf]
        %v1349 = vld [vmem:[%s12 + $0x4] sm:$0xf]
        %v1350 = vld [vmem:[%s12 + $0x8] sm:$0xf]
        %v1351 = vld [vmem:[%s12 + $0xc] sm:$0xf]
        %v1352 = vld [vmem:[%s12 + $0x10] sm:$0xf]
        %v1353 = vld [vmem:[%s12 + $0x14] sm:$0xf]
        %v1354 = vld [vmem:[%s12 + $0x18] sm:$0xf]
        %v1355 = vld [vmem:[%s12 + $0x1c] sm:$0xf]
        %v1356 = vld [vmem:[%s12 + $0x20] sm:$0xf]
        %v1357 = vld [vmem:[%s12 + $0x24] sm:$0xf]
        %v1358 = vld [vmem:[%s12 + $0x28] sm:$0xf]
        %v1359 = vld [vmem:[%s12 + $0x2c] sm:$0xf]
        %v1360 = vld [vmem:[%s12 + $0x30] sm:$0xf]
        %v1361 = vld [vmem:[%s12 + $0x34] sm:$0xf]
        %v1362 = vld [vmem:[%s12 + $0x38] sm:$0xf]
        %v1363 = vld [vmem:[%s12 + $0x3c] sm:$0xf]
        %v1364 = vld [vmem:[%s13] sm:$0x1]
        %v1366 = vlaneseq
        %v1367 = vshrl.u32 %v1366, 7
        %v1368 = vsub.s32 0, %v1367
        %v1369 = vrot.slane %v1364, %v1368
        %v1387 = vunpack.c.l.b16 %v1348
        %v1388 = vunpack.c.l.b16 %v1349
        %v1389 = vunpack.c.l.b16 %v1350
        %v1390 = vunpack.c.l.b16 %v1351
        %v1391 = vunpack.c.l.b16 %v1352
        %v1392 = vunpack.c.l.b16 %v1353
        %v1393 = vunpack.c.l.b16 %v1354
        %v1394 = vunpack.c.l.b16 %v1355
        %v1395 = vunpack.c.l.b16 %v1356
        %v1396 = vunpack.c.l.b16 %v1357
        %v1397 = vunpack.c.l.b16 %v1358
        %v1398 = vunpack.c.l.b16 %v1359
        %v1399 = vunpack.c.l.b16 %v1360
        %v1400 = vunpack.c.l.b16 %v1361
        %v1401 = vunpack.c.l.b16 %v1362
        %v1402 = vunpack.c.l.b16 %v1363
        %v1403 = vpack.c.b16 %v1388, %v1387
        %v1404 = vpack.c.b16 %v1390, %v1389
        %v1405 = vpack.c.b16 %v1392, %v1391
        %v1406 = vpack.c.b16 %v1394, %v1393
        %v1407 = vpack.c.b16 %v1396, %v1395
        %v1408 = vpack.c.b16 %v1398, %v1397
        %v1409 = vpack.c.b16 %v1400, %v1399
        %v1410 = vpack.c.b16 %v1402, %v1401
        %1419 = vmatprep.subr.bf16.mxu0 0
        %1420 = vmatpush1.bf16.msra.mxu0 %v1410
        %1421 = vmatprep.subr.bf16.mxu0 0
        %1422 = vmatpush1.bf16.msra.mxu0 %v1409
        %1423 = vmatprep.subr.bf16.mxu0 0
        %1424 = vmatpush1.bf16.msra.mxu0 %v1408
        %1425 = vmatprep.subr.bf16.mxu0 0
        %1426 = vmatpush1.bf16.msra.mxu0 %v1407
        %1427 = vmatprep.subr.bf16.mxu0 0
        %1428 = vmatpush1.bf16.msra.mxu0 %v1406
        %1429 = vmatprep.subr.bf16.mxu0 0
        %1430 = vmatpush1.bf16.msra.mxu0 %v1405
        %1431 = vmatprep.subr.bf16.mxu0 0
        %1432 = vmatpush1.bf16.msra.mxu0 %v1404
        %1433 = vmatprep.subr.bf16.mxu0 0
        %1434 = vmatpush1.bf16.msra.mxu0 %v1403
        %1435 = vmatprep.subr.bf16.mxu0 0
        %1436 = vmatpush2.bf16.msra.mxu0 0
        %1437 = vmatprep.subr.bf16.mxu0 0
        %1438 = vmatpush2.bf16.msra.mxu0 0
        %1439 = vmatprep.subr.bf16.mxu0 0
        %1440 = vmatpush2.bf16.msra.mxu0 0
        %1441 = vmatprep.subr.bf16.mxu0 0
        %1442 = vmatpush2.bf16.msra.mxu0 0
        %1443 = vmatprep.subr.bf16.mxu0 0
        %1444 = vmatpush2.bf16.msra.mxu0 0
        %1445 = vmatprep.subr.bf16.mxu0 0
        %1446 = vmatpush2.bf16.msra.mxu0 0
        %1447 = vmatprep.subr.bf16.mxu0 0
        %1448 = vmatpush2.bf16.msra.mxu0 0
        %1449 = vmatprep.subr.bf16.mxu0 0
        %1450 = vmatpush2.bf16.msra.mxu0 0
        %1451 = vmatprep.mubr.bf16.mxu0 0
        %1452 = vmatmul.mubr.bf16.gmra.mxu0 %v1347
        %v1453 = vpop.f32.mrf.mxu0
        %v1454 = vadd.f32 %v1369, %v1453
        %v1455 = vpop.f32.mrf.mxu0
        %v1456 = vpop.f32.mrf.mxu0
        %v1457 = vpop.f32.mrf.mxu0
        %1458 = vdwg.mxu0
        %v1459 = vadd.f32 %v1249, %v1454
        %1460 = vst.msk [vmem:[%s500] sm:$0xff] %vm509, %v1459
        %s1461 = sand.u32 %s351, 1
        %s1462 = scalar_lea.sflag [#allocation5], %s1461
        %s1463 = sand.u32 %s351, 1
        %s1464 = smul.addr %s1463, 8
        %s1465 = scalar_lea.vmem [#allocation8], %s1464
        // Predicated region
        $region85: #{tpu_custom_call.1} parent=75 // pred_check
          %p1466 = pneg %p361
        $region86: #{tpu_custom_call.1} parent=75 // pred_check_branch
          %1468 = sbr.rel (%p1466) target = $region88
        $region87: #{tpu_custom_call.1} parent=75 // pred_region
          %s1470 = ssub.s32 128, 128
          %1471 = vsyncadd %s1462, %s1470
          %s1472 = sadd.s32 %s35, %s34
          %s1473 = smul.addr %s1472, 128
          %s1474 = scalar_lea.hbm %s14, %s1473
          %s1476 = sshll.u32 %s1465, 4
          %s1477 = int_to_ptr.vmem [resolvable:$true] %s1476
          %1479 = dma.vmem_to_hbm [thread:$0]  %s1477, 128, %s1474, %s1462
        $region88: #{tpu_custom_call.1} parent=75 // pred_fallthru
          _
      $region76: #{tpu_custom_call.1} parent=5 // pred_fallthru
        _
      %p1480 = scmp.le.s32.totalorder 2, %s25
      // Predicated region
      $region89: #{tpu_custom_call.1} parent=5 // pred_check
        %p1481 = pneg %p1480
      $region90: #{tpu_custom_call.1} parent=5 // pred_check_branch
        %1483 = sbr.rel (%p1481) target = $region92
      $region91: #{tpu_custom_call.1} parent=5 // pred_region
        %s1484 = ssub.s32 %s25, 2
        // Predicated region
        $region93: #{tpu_custom_call.1} parent=91 // pred_check
          %p1485 = pneg %p367
        $region94: #{tpu_custom_call.1} parent=91 // pred_check_branch
          %1487 = sbr.rel (%p1485) target = $region96
        $region95: #{tpu_custom_call.1} parent=91 // pred_region
          %s1488 = sand.u32 %s352, 1
          %s1489 = scalar_lea.sflag [#allocation5], %s1488
          %s1490 = sand.u32 %s352, 1
          %s1491 = smul.addr %s1490, 8
          %s1492 = scalar_lea.vmem [#allocation8], %s1491
          %1493 = dma.done %s1489, 128
        $region96: #{tpu_custom_call.1} parent=91 // pred_fallthru
          _
      $region92: #{tpu_custom_call.1} parent=5 // pred_fallthru
        _
    $region6: #{tpu_custom_call.1} parent=1 // loop_footer
      %s29 = sadd.s32 1, %s25
    $region7: #{tpu_custom_call.1} parent=1 // loop_footer_branch
      %24 = sbr.rel target = $region3
    $region8: #{tpu_custom_call.1} parent=1 // loop_exit
      _
    %1494 = vsyncpa [#allocation4], 1
    %s1495 = scalar_lea.sflag [#allocation4], 1
    %1496 = vsyncpa %s1495, 1
    %1497 = vsyncpa [#allocation7], 1
    %1498 = vsyncpa [#allocation5], 1
    %s1499 = scalar_lea.sflag [#allocation5], 1
    %1500 = vsyncpa %s1499, 1

</llo_original>
